<compile_context>
chip_gen: v6e
topology: v6e:2x2x1
jax: 0.10.0
libtpu: 0.0.40
codegen_flags: <defaults>
</compile_context>

<pallas_src>
import functools

import jax
import jax.numpy as jnp
from jax import lax
from jax.experimental import pallas as pl
from jax.experimental.pallas import tpu as pltpu


# ----------------------------- small helpers --------------------------------

def _round_up(x, m):
    return ((x + m - 1) // m) * m


def _vmem_limit_bytes():
    """Generation-aware scoped-VMEM request (v7x: 64 MiB/core, v5e/v6e: 128 MiB)."""
    cap = 64 * 1024 * 1024  # conservative default = v7x per-core VMEM
    try:
        info = pltpu.get_tpu_info()
        cap = int(getattr(info, "vmem_capacity_bytes", cap)) or cap
    except Exception:
        pass
    return int(min(cap * 3 // 4, 96 * 1024 * 1024))


def _pick_block_t(seq_len, max_block):
    """Largest divisor of seq_len <= max_block, preferring multiples of 8."""
    best_any, best_8 = 1, None
    for cand in range(1, min(seq_len, max_block) + 1):
        if seq_len % cand:
            continue
        best_any = cand
        if cand % 8 == 0:
            best_8 = cand
    return best_8 if best_8 is not None else best_any


def _max_block_t(block_b, hidden, t_pad, d_in, budget_bytes):
    """Cap block_t so the per-block slabs (gates + h_slab + pipelined x/y) fit the budget."""
    per_t = block_b * 4 * (5 * hidden + 2 * t_pad + 2 * d_in)
    return int(max(8, min(128, budget_bytes // max(per_t, 1))))


def _const_spec(shape):
    """BlockSpec for a grid-invariant (weight) input; single-buffered when supported."""
    idx = lambda b, t: (0, 0)
    try:
        return pl.BlockSpec(shape, idx, pipeline_mode=pl.Buffered(1))
    except Exception:  # older API without pipeline_mode / Buffered
        return pl.BlockSpec(shape, idx)


# --------------------------------- kernel -----------------------------------

def _lstmnet_kernel(*refs, hidden_dim, block_t, fold, unroll):
    if fold:
        (x_ref, w_xg_ref, b_gate_ref, w_hh_ref, w_tag_ref, b_tag_ref,
         y_ref, hn_ref, cn_ref, gates_ref, hslab_ref) = refs
    else:
        (x_ref, w_emb_ref, b_emb_ref, w_ih_ref, b_gate_ref, w_hh_ref,
         w_tag_ref, b_tag_ref,
         y_ref, hn_ref, cn_ref, gates_ref, hslab_ref) = refs

    H = hidden_dim
    Tc = block_t
    Bb = x_ref.shape[1]            # x block is time-major: (Tc, Bb, D_in)
    D_in = x_ref.shape[2]
    T_pad = y_ref.shape[2]

    @pl.when(pl.program_id(1) == 0)   # first time-block of this batch-block
    def _():
        hn_ref[...] = jnp.zeros_like(hn_ref)
        cn_ref[...] = jnp.zeros_like(cn_ref)

    mm_dtype = w_hh_ref.dtype      # f32 by default; bf16 if the wrapper casts weights

    # ---- hoisted input projection: one (Tc*Bb, .) MXU pass per block -------
    x_2d = x_ref[...].reshape(Tc * Bb, D_in)
    if fold:
        gates_x = jnp.dot(x_2d.astype(mm_dtype), w_xg_ref[...],
                          preferred_element_type=jnp.float32) + b_gate_ref[...]
    else:
        emb = jnp.dot(x_2d.astype(mm_dtype), w_emb_ref[...],
                      preferred_element_type=jnp.float32) + b_emb_ref[...]
        gates_x = jnp.dot(emb.astype(mm_dtype), w_ih_ref[...],
                          preferred_element_type=jnp.float32) + b_gate_ref[...]
    gates_ref[...] = gates_x.reshape(Tc, Bb, 4 * H)     # time-major gates slab

    # ---- serial recurrence: only h @ w_hh per step; leading-axis slab access
    w_hh = w_hh_ref[...]

    def step(s, carry):
        h, c = carry
        g = gates_ref[s] + jnp.dot(h.astype(mm_dtype), w_hh,
                                   preferred_element_type=jnp.float32)
        i_g = jax.nn.sigmoid(g[:, 0 * H:1 * H])
        f_g = jax.nn.sigmoid(g[:, 1 * H:2 * H])
        g_g = jnp.tanh(g[:, 2 * H:3 * H])
        o_g = jax.nn.sigmoid(g[:, 3 * H:4 * H])
        c = f_g * c + i_g * g_g
        h = o_g * jnp.tanh(c)
        hslab_ref[s] = h
        return (h, c)

    h, c = lax.fori_loop(0, Tc, step, (hn_ref[...], cn_ref[...]), unroll=unroll)
    hn_ref[...] = h
    cn_ref[...] = c

    # ---- hoisted, lane-dense output projection ------------------------------
    h_all = hslab_ref[...].reshape(Tc * Bb, H)
    y = jnp.dot(h_all.astype(mm_dtype), w_tag_ref[...],
                preferred_element_type=jnp.float32) + b_tag_ref[...]
    y_ref[...] = y.reshape(Tc, Bb, T_pad)


# --------------------------------- wrapper ----------------------------------

def lstmnet_forward(x_bsd, params, *, use_bf16_matmul=False, max_block_t=None):
    """x_bsd: (B, S, input_dim) float32, PyTorch batch_first. Returns (y, (h_n, c_n))."""
    B, S, D_in = x_bsd.shape
    E = params["w_emb"].shape[1]
    H = params["w_hh"].shape[0]
    T = params["w_tag"].shape[1]
    T_pad = _round_up(T, 128)                       # lane-dense tag output

    # batch: pad to a sublane multiple; split into 2 batch blocks (v7x megacore)
    B_pad = _round_up(B, 8)
    block_b = B_pad // 2 if (B_pad >= 16 and B_pad % 16 == 0) else B_pad
    grid_b = B_pad // block_b

    vmem_limit = _vmem_limit_bytes()
    cap_bt = _max_block_t(block_b, H, T_pad, D_in, vmem_limit // 4)
    if max_block_t is not None:
        cap_bt = min(cap_bt, max_block_t)
    block_t = _pick_block_t(S, cap_bt)
    grid_t = S // block_t
    unroll = block_t if block_t <= 8 else 8

    # fold the embedding Linear into the LSTM input projection when it is cheaper
    fold = D_in * 4 * H <= D_in * E + E * 4 * H

    f32 = jnp.float32
    w_dtype = jnp.bfloat16 if use_bf16_matmul else f32
    b_gate = (params["b_ih"] + params["b_hh"]).astype(f32)            # (1, 4H)
    w_hh = params["w_hh"].astype(w_dtype)
    w_tag_pad = jnp.pad(params["w_tag"].astype(f32),
                        ((0, 0), (0, T_pad - T))).astype(w_dtype)
    b_tag_pad = jnp.pad(params["b_tag"].astype(f32), ((0, 0), (0, T_pad - T)))

    if fold:
        w_xg = params["w_emb"].astype(f32) @ params["w_ih"].astype(f32)   # (D_in, 4H)
        b_gate = params["b_emb"].astype(f32) @ params["w_ih"].astype(f32) + b_gate
        weight_args = [w_xg.astype(w_dtype), b_gate]
        weight_specs = [_const_spec((D_in, 4 * H)), _const_spec((1, 4 * H))]
    else:
        weight_args = [params["w_emb"].astype(w_dtype), params["b_emb"].astype(f32),
                       params["w_ih"].astype(w_dtype), b_gate]
        weight_specs = [_const_spec((D_in, E)), _const_spec((1, E)),
                        _const_spec((E, 4 * H)), _const_spec((1, 4 * H))]
    weight_args += [w_hh, w_tag_pad, b_tag_pad]
    weight_specs += [_const_spec((H, 4 * H)), _const_spec((H, T_pad)),
                     _const_spec((1, T_pad))]

    # one wrapper-side relayout to time-major + batch pad (layout plumbing only)
    x_tm = jnp.transpose(x_bsd.astype(f32), (1, 0, 2))                # (S, B, D_in)
    if B_pad != B:
        x_tm = jnp.pad(x_tm, ((0, 0), (0, B_pad - B), (0, 0)))

    kernel = functools.partial(_lstmnet_kernel, hidden_dim=H, block_t=block_t,
                               fold=fold, unroll=unroll)

    y_tm, h_n, c_n = pl.pallas_call(
        kernel,
        out_shape=(
            jax.ShapeDtypeStruct((S, B_pad, T_pad), f32),
            jax.ShapeDtypeStruct((B_pad, H), f32),
            jax.ShapeDtypeStruct((B_pad, H), f32),
        ),
        grid_spec=pltpu.PrefetchScalarGridSpec(
            num_scalar_prefetch=0,
            grid=(grid_b, grid_t),
            in_specs=[pl.BlockSpec((block_t, block_b, D_in), lambda b, t: (t, b, 0))]
                     + weight_specs,
            out_specs=[
                pl.BlockSpec((block_t, block_b, T_pad), lambda b, t: (t, b, 0)),
                pl.BlockSpec((block_b, H), lambda b, t: (b, 0)),   # resident carry h
                pl.BlockSpec((block_b, H), lambda b, t: (b, 0)),   # resident carry c
            ],
            scratch_shapes=[
                pltpu.VMEM((block_t, block_b, 4 * H), f32),        # time-major gates
                pltpu.VMEM((block_t, block_b, H), f32),            # time-major h slab
            ],
        ),
        compiler_params=pltpu.CompilerParams(
            dimension_semantics=("parallel", "arbitrary"),
            vmem_limit_bytes=vmem_limit),
    )(x_tm, *weight_args)

    y = jnp.transpose(y_tm[:, :B, :T], (1, 0, 2))                     # (B, S, T)
    # PyTorch LSTM returns (h_n, c_n) with shape (num_layers=1, B, H)
    return y, (h_n[None, :B, :], c_n[None, :B, :])


# ----------------------------- pure-JAX reference ---------------------------

def reference_forward(x_bsd, params):
    H = params["w_hh"].shape[0]
    emb = x_bsd @ params["w_emb"] + params["b_emb"]                   # (B, S, E)
    B = emb.shape[0]

    def step(carry, x_t):
        h, c = carry
        gates = (x_t @ params["w_ih"] + h @ params["w_hh"]
                 + params["b_ih"] + params["b_hh"])
        i = jax.nn.sigmoid(gates[:, 0 * H:1 * H])
        f = jax.nn.sigmoid(gates[:, 1 * H:2 * H])
        g = jnp.tanh(gates[:, 2 * H:3 * H])
        o = jax.nn.sigmoid(gates[:, 3 * H:4 * H])
        c = f * c + i * g
        h = o * jnp.tanh(c)
        return (h, c), h

    h0 = jnp.zeros((B, H), jnp.float32)
    c0 = jnp.zeros((B, H), jnp.float32)
    (h_n, c_n), hs = jax.lax.scan(step, (h0, c0), jnp.transpose(emb, (1, 0, 2)))
    hs = jnp.transpose(hs, (1, 0, 2))                                 # (B, S, H)
    y = hs @ params["w_tag"] + params["b_tag"]
    return y, (h_n[None], c_n[None])


def init_params(key, input_dim, emb_dim, hidden_dim, tagset_size):
    ks = jax.random.split(key, 8)
    scale = 0.1
    # Stored pre-transposed relative to PyTorch's (out_features, in_features).
    return {
        "w_emb": scale * jax.random.normal(ks[0], (input_dim, emb_dim), jnp.float32),
        "b_emb": scale * jax.random.normal(ks[1], (1, emb_dim), jnp.float32),
        "w_ih":  scale * jax.random.normal(ks[2], (emb_dim, 4 * hidden_dim), jnp.float32),
        "w_hh":  scale * jax.random.normal(ks[3], (hidden_dim, 4 * hidden_dim), jnp.float32),
        "b_ih":  scale * jax.random.normal(ks[4], (1, 4 * hidden_dim), jnp.float32),
        "b_hh":  scale * jax.random.normal(ks[5], (1, 4 * hidden_dim), jnp.float32),
        "w_tag": scale * jax.random.normal(ks[6], (hidden_dim, tagset_size), jnp.float32),
        "b_tag": scale * jax.random.normal(ks[7], (1, tagset_size), jnp.float32),
    }


if __name__ == "__main__":
    input_dim, emb_dim, hidden_dim, tagset_size = 4, 16, 32, 3
    key = jax.random.PRNGKey(0)
    kx1, kx2, kx3, kp = jax.random.split(key, 4)
    params = init_params(kp, input_dim, emb_dim, hidden_dim, tagset_size)

    def check(x, **kw):
        y, (h_n, c_n) = lstmnet_forward(x, params, **kw)
        jax.block_until_ready((y, h_n, c_n))
        y_r, (h_r, c_r) = reference_forward(x, params)
        assert y.shape == (x.shape[0], x.shape[1], tagset_size)
        assert h_n.shape == (1, x.shape[0], hidden_dim)
        assert c_n.shape == (1, x.shape[0], hidden_dim)
        assert jnp.allclose(y, y_r, atol=1e-5, rtol=1e-5)
        assert jnp.allclose(h_n, h_r, atol=1e-5, rtol=1e-5)
        assert jnp.allclose(c_n, c_r, atol=1e-5, rtol=1e-5)

    # base case (batch padded 2 -> 8, single time block)
    check(jax.random.normal(kx1, (2, 8, input_dim), jnp.float32))
    # multiple time blocks (exercises the resident h/c carry + pl.when init)
    check(jax.random.normal(kx2, (2, 16, input_dim), jnp.float32), max_block_t=8)
    # batch-block grid axis (v7x two-TensorCore "parallel" sharding path)
    check(jax.random.normal(kx3, (16, 16, input_dim), jnp.float32))

    print("KERNEL_OK")
</pallas_src>

<mosaic_0001>
module attributes {stable_mosaic.version = 11 : i64} {
  func.func @_lstmnet_kernel(%arg0: i32, %arg1: i32, %arg2: memref<8x8x4xf32, #tpu.memory_space<vmem>>, %arg3: memref<4x128xf32, #tpu.memory_space<vmem>>, %arg4: memref<1x128xf32, #tpu.memory_space<vmem>>, %arg5: memref<32x128xf32, #tpu.memory_space<vmem>>, %arg6: memref<32x128xf32, #tpu.memory_space<vmem>>, %arg7: memref<1x128xf32, #tpu.memory_space<vmem>>, %arg8: memref<8x8x128xf32, #tpu.memory_space<vmem>>, %arg9: memref<8x32xf32, #tpu.memory_space<vmem>>, %arg10: memref<8x32xf32, #tpu.memory_space<vmem>>, %arg11: memref<8x8x128xf32, #tpu.memory_space<vmem>>, %arg12: memref<8x8x32xf32, #tpu.memory_space<vmem>>) attributes {dimension_semantics = [#tpu.dimension_semantics<parallel>, #tpu.dimension_semantics<arbitrary>], iteration_bounds = array<i64: 1, 1>, scalar_prefetch = 0 : i64, scratch_operands = 2 : i64, tpu.core_type = #tpu.core_type<tc>, window_params = [{transform_indices = @transform_0, window_bounds = array<i64: 8, 8, 4>}, {pipeline_mode = #tpu.pipeline_mode<synchronous>, transform_indices = @transform_1, window_bounds = array<i64: 4, 128>}, {pipeline_mode = #tpu.pipeline_mode<synchronous>, transform_indices = @transform_2, window_bounds = array<i64: 1, 128>}, {pipeline_mode = #tpu.pipeline_mode<synchronous>, transform_indices = @transform_3, window_bounds = array<i64: 32, 128>}, {pipeline_mode = #tpu.pipeline_mode<synchronous>, transform_indices = @transform_4, window_bounds = array<i64: 32, 128>}, {pipeline_mode = #tpu.pipeline_mode<synchronous>, transform_indices = @transform_5, window_bounds = array<i64: 1, 128>}, {transform_indices = @transform_6, window_bounds = array<i64: 8, 8, 128>}, {transform_indices = @transform_7, window_bounds = array<i64: 8, 32>}, {transform_indices = @transform_8, window_bounds = array<i64: 8, 32>}]} {
    %c0_i32 = arith.constant 0 : i32
    %0 = arith.cmpi eq, %arg1, %c0_i32 : i32
    %1 = arith.extui %0 : i1 to i32
    %c0_i32_0 = arith.constant 0 : i32
    %2 = arith.cmpi ne, %1, %c0_i32_0 : i32
    scf.if %2 {
      %cst_96 = arith.constant 0.000000e+00 : f32
      %298 = vector.broadcast %cst_96 : f32 to vector<8x32xf32>
      %c0_97 = arith.constant 0 : index
      %c0_98 = arith.constant 0 : index
      %299 = vector.load %arg9[%c0_97, %c0_98] : memref<8x32xf32, #tpu.memory_space<vmem>>, vector<8x32xf32>
      tpu.vector_store %arg9[%c0_97, %c0_98], %298 {strides = array<i32>} : memref<8x32xf32, #tpu.memory_space<vmem>>, vector<8x32xf32>,
      %cst_99 = arith.constant 0.000000e+00 : f32
      %300 = vector.broadcast %cst_99 : f32 to vector<8x32xf32>
      %c0_100 = arith.constant 0 : index
      %c0_101 = arith.constant 0 : index
      %301 = vector.load %arg10[%c0_100, %c0_101] : memref<8x32xf32, #tpu.memory_space<vmem>>, vector<8x32xf32>
      tpu.vector_store %arg10[%c0_100, %c0_101], %300 {strides = array<i32>} : memref<8x32xf32, #tpu.memory_space<vmem>>, vector<8x32xf32>,
    } else {
    }
    %c0 = arith.constant 0 : index
    %c0_1 = arith.constant 0 : index
    %c0_2 = arith.constant 0 : index
    %3 = vector.load %arg2[%c0, %c0_1, %c0_2] : memref<8x8x4xf32, #tpu.memory_space<vmem>>, vector<8x8x4xf32>
    %4 = vector.shape_cast %3 : vector<8x8x4xf32> to vector<64x4xf32>
    %c0_3 = arith.constant 0 : index
    %c0_4 = arith.constant 0 : index
    %5 = vector.load %arg3[%c0_3, %c0_4] : memref<4x128xf32, #tpu.memory_space<vmem>>, vector<4x128xf32>
    %cst = arith.constant dense<0.000000e+00> : vector<64x128xf32>
    %6 = tpu.matmul %4, %5, %cst {dimension_numbers = #tpu.dot_dimension_numbers<[1], [0], [0], [1], [0, 0, 1, 1], [], []>} : vector<64x4xf32>, vector<4x128xf32>, vector<64x128xf32> -> vector<64x128xf32>
    %c0_5 = arith.constant 0 : index
    %c0_6 = arith.constant 0 : index
    %7 = vector.load %arg4[%c0_5, %c0_6] : memref<1x128xf32, #tpu.memory_space<vmem>>, vector<1x128xf32>
    %8 = vector.broadcast %7 : vector<1x128xf32> to vector<64x128xf32>
    %9 = arith.addf %6, %8 : vector<64x128xf32>
    %10 = vector.shape_cast %9 : vector<64x128xf32> to vector<8x8x128xf32>
    %c0_7 = arith.constant 0 : index
    %c0_8 = arith.constant 0 : index
    %c0_9 = arith.constant 0 : index
    %11 = vector.load %arg11[%c0_7, %c0_8, %c0_9] : memref<8x8x128xf32, #tpu.memory_space<vmem>>, vector<8x8x128xf32>
    tpu.vector_store %arg11[%c0_7, %c0_8, %c0_9], %10 {strides = array<i32>} : memref<8x8x128xf32, #tpu.memory_space<vmem>>, vector<8x8x128xf32>,
    %c0_10 = arith.constant 0 : index
    %c0_11 = arith.constant 0 : index
    %12 = vector.load %arg5[%c0_10, %c0_11] : memref<32x128xf32, #tpu.memory_space<vmem>>, vector<32x128xf32>
    %c0_12 = arith.constant 0 : index
    %c0_13 = arith.constant 0 : index
    %13 = vector.load %arg9[%c0_12, %c0_13] : memref<8x32xf32, #tpu.memory_space<vmem>>, vector<8x32xf32>
    %c0_14 = arith.constant 0 : index
    %c0_15 = arith.constant 0 : index
    %14 = vector.load %arg10[%c0_14, %c0_15] : memref<8x32xf32, #tpu.memory_space<vmem>>, vector<8x32xf32>
    %c0_i32_16 = arith.constant 0 : i32
    %15 = arith.index_cast %c0_i32_16 : i32 to index
    %c0_17 = arith.constant 0 : index
    %c0_18 = arith.constant 0 : index
    %16 = vector.load %arg11[%15, %c0_17, %c0_18] : memref<8x8x128xf32, #tpu.memory_space<vmem>>, vector<1x8x128xf32>
    %17 = vector.shape_cast %16 : vector<1x8x128xf32> to vector<8x128xf32>
    %cst_19 = arith.constant dense<0.000000e+00> : vector<8x128xf32>
    %18 = tpu.matmul %13, %12, %cst_19 {dimension_numbers = #tpu.dot_dimension_numbers<[1], [0], [0], [1], [0, 0, 1, 1], [], []>} : vector<8x32xf32>, vector<32x128xf32>, vector<8x128xf32> -> vector<8x128xf32>
    %19 = arith.addf %17, %18 : vector<8x128xf32>
    %20 = vector.extract_strided_slice %19 {offsets = [0, 0], sizes = [8, 32], strides = [1, 1]} : vector<8x128xf32> to vector<8x32xf32>
    %21 = arith.negf %20 : vector<8x32xf32>
    %22 = math.exp %21 : vector<8x32xf32>
    %cst_20 = arith.constant 1.000000e+00 : f32
    %23 = vector.broadcast %cst_20 : f32 to vector<8x32xf32>
    %24 = arith.addf %23, %22 : vector<8x32xf32>
    %25 = arith.divf %23, %24 : vector<8x32xf32>
    %26 = vector.extract_strided_slice %19 {offsets = [0, 32], sizes = [8, 32], strides = [1, 1]} : vector<8x128xf32> to vector<8x32xf32>
    %27 = arith.negf %26 : vector<8x32xf32>
    %28 = math.exp %27 : vector<8x32xf32>
    %cst_21 = arith.constant 1.000000e+00 : f32
    %29 = vector.broadcast %cst_21 : f32 to vector<8x32xf32>
    %30 = arith.addf %29, %28 : vector<8x32xf32>
    %31 = arith.divf %29, %30 : vector<8x32xf32>
    %32 = vector.extract_strided_slice %19 {offsets = [0, 64], sizes = [8, 32], strides = [1, 1]} : vector<8x128xf32> to vector<8x32xf32>
    %33 = math.tanh %32 : vector<8x32xf32>
    %34 = vector.extract_strided_slice %19 {offsets = [0, 96], sizes = [8, 32], strides = [1, 1]} : vector<8x128xf32> to vector<8x32xf32>
    %35 = arith.negf %34 : vector<8x32xf32>
    %36 = math.exp %35 : vector<8x32xf32>
    %cst_22 = arith.constant 1.000000e+00 : f32
    %37 = vector.broadcast %cst_22 : f32 to vector<8x32xf32>
    %38 = arith.addf %37, %36 : vector<8x32xf32>
    %39 = arith.divf %37, %38 : vector<8x32xf32>
    %40 = arith.mulf %31, %14 : vector<8x32xf32>
    %41 = arith.mulf %25, %33 : vector<8x32xf32>
    %42 = arith.addf %40, %41 : vector<8x32xf32>
    %43 = math.tanh %42 : vector<8x32xf32>
    %44 = arith.mulf %39, %43 : vector<8x32xf32>
    %45 = arith.index_cast %c0_i32_16 : i32 to index
    %c0_23 = arith.constant 0 : index
    %c0_24 = arith.constant 0 : index
    %46 = vector.load %arg12[%45, %c0_23, %c0_24] : memref<8x8x32xf32, #tpu.memory_space<vmem>>, vector<1x8x32xf32>
    %47 = vector.shape_cast %46 : vector<1x8x32xf32> to vector<8x32xf32>
    %48 = vector.shape_cast %44 : vector<8x32xf32> to vector<1x8x32xf32>
    tpu.vector_store %arg12[%45, %c0_23, %c0_24], %48 {strides = array<i32>} : memref<8x8x32xf32, #tpu.memory_space<vmem>>, vector<1x8x32xf32>,
    %c1_i32 = arith.constant 1 : i32
    %49 = arith.index_cast %c1_i32 : i32 to index
    %c0_25 = arith.constant 0 : index
    %c0_26 = arith.constant 0 : index
    %50 = vector.load %arg11[%49, %c0_25, %c0_26] : memref<8x8x128xf32, #tpu.memory_space<vmem>>, vector<1x8x128xf32>
    %51 = vector.shape_cast %50 : vector<1x8x128xf32> to vector<8x128xf32>
    %cst_27 = arith.constant dense<0.000000e+00> : vector<8x128xf32>
    %52 = tpu.matmul %44, %12, %cst_27 {dimension_numbers = #tpu.dot_dimension_numbers<[1], [0], [0], [1], [0, 0, 1, 1], [], []>} : vector<8x32xf32>, vector<32x128xf32>, vector<8x128xf32> -> vector<8x128xf32>
    %53 = arith.addf %51, %52 : vector<8x128xf32>
    %54 = vector.extract_strided_slice %53 {offsets = [0, 0], sizes = [8, 32], strides = [1, 1]} : vector<8x128xf32> to vector<8x32xf32>
    %55 = arith.negf %54 : vector<8x32xf32>
    %56 = math.exp %55 : vector<8x32xf32>
    %cst_28 = arith.constant 1.000000e+00 : f32
    %57 = vector.broadcast %cst_28 : f32 to vector<8x32xf32>
    %58 = arith.addf %57, %56 : vector<8x32xf32>
    %59 = arith.divf %57, %58 : vector<8x32xf32>
    %60 = vector.extract_strided_slice %53 {offsets = [0, 32], sizes = [8, 32], strides = [1, 1]} : vector<8x128xf32> to vector<8x32xf32>
    %61 = arith.negf %60 : vector<8x32xf32>
    %62 = math.exp %61 : vector<8x32xf32>
    %cst_29 = arith.constant 1.000000e+00 : f32
    %63 = vector.broadcast %cst_29 : f32 to vector<8x32xf32>
    %64 = arith.addf %63, %62 : vector<8x32xf32>
    %65 = arith.divf %63, %64 : vector<8x32xf32>
    %66 = vector.extract_strided_slice %53 {offsets = [0, 64], sizes = [8, 32], strides = [1, 1]} : vector<8x128xf32> to vector<8x32xf32>
    %67 = math.tanh %66 : vector<8x32xf32>
    %68 = vector.extract_strided_slice %53 {offsets = [0, 96], sizes = [8, 32], strides = [1, 1]} : vector<8x128xf32> to vector<8x32xf32>
    %69 = arith.negf %68 : vector<8x32xf32>
    %70 = math.exp %69 : vector<8x32xf32>
    %cst_30 = arith.constant 1.000000e+00 : f32
    %71 = vector.broadcast %cst_30 : f32 to vector<8x32xf32>
    %72 = arith.addf %71, %70 : vector<8x32xf32>
    %73 = arith.divf %71, %72 : vector<8x32xf32>
    %74 = arith.mulf %65, %42 : vector<8x32xf32>
    %75 = arith.mulf %59, %67 : vector<8x32xf32>
    %76 = arith.addf %74, %75 : vector<8x32xf32>
    %77 = math.tanh %76 : vector<8x32xf32>
    %78 = arith.mulf %73, %77 : vector<8x32xf32>
    %79 = arith.index_cast %c1_i32 : i32 to index
    %c0_31 = arith.constant 0 : index
    %c0_32 = arith.constant 0 : index
    %80 = vector.load %arg12[%79, %c0_31, %c0_32] : memref<8x8x32xf32, #tpu.memory_space<vmem>>, vector<1x8x32xf32>
    %81 = vector.shape_cast %80 : vector<1x8x32xf32> to vector<8x32xf32>
    %82 = vector.shape_cast %78 : vector<8x32xf32> to vector<1x8x32xf32>
    tpu.vector_store %arg12[%79, %c0_31, %c0_32], %82 {strides = array<i32>} : memref<8x8x32xf32, #tpu.memory_space<vmem>>, vector<1x8x32xf32>,
    %c2_i32 = arith.constant 2 : i32
    %83 = arith.index_cast %c2_i32 : i32 to index
    %c0_33 = arith.constant 0 : index
    %c0_34 = arith.constant 0 : index
    %84 = vector.load %arg11[%83, %c0_33, %c0_34] : memref<8x8x128xf32, #tpu.memory_space<vmem>>, vector<1x8x128xf32>
    %85 = vector.shape_cast %84 : vector<1x8x128xf32> to vector<8x128xf32>
    %cst_35 = arith.constant dense<0.000000e+00> : vector<8x128xf32>
    %86 = tpu.matmul %78, %12, %cst_35 {dimension_numbers = #tpu.dot_dimension_numbers<[1], [0], [0], [1], [0, 0, 1, 1], [], []>} : vector<8x32xf32>, vector<32x128xf32>, vector<8x128xf32> -> vector<8x128xf32>
    %87 = arith.addf %85, %86 : vector<8x128xf32>
    %88 = vector.extract_strided_slice %87 {offsets = [0, 0], sizes = [8, 32], strides = [1, 1]} : vector<8x128xf32> to vector<8x32xf32>
    %89 = arith.negf %88 : vector<8x32xf32>
    %90 = math.exp %89 : vector<8x32xf32>
    %cst_36 = arith.constant 1.000000e+00 : f32
    %91 = vector.broadcast %cst_36 : f32 to vector<8x32xf32>
    %92 = arith.addf %91, %90 : vector<8x32xf32>
    %93 = arith.divf %91, %92 : vector<8x32xf32>
    %94 = vector.extract_strided_slice %87 {offsets = [0, 32], sizes = [8, 32], strides = [1, 1]} : vector<8x128xf32> to vector<8x32xf32>
    %95 = arith.negf %94 : vector<8x32xf32>
    %96 = math.exp %95 : vector<8x32xf32>
    %cst_37 = arith.constant 1.000000e+00 : f32
    %97 = vector.broadcast %cst_37 : f32 to vector<8x32xf32>
    %98 = arith.addf %97, %96 : vector<8x32xf32>
    %99 = arith.divf %97, %98 : vector<8x32xf32>
    %100 = vector.extract_strided_slice %87 {offsets = [0, 64], sizes = [8, 32], strides = [1, 1]} : vector<8x128xf32> to vector<8x32xf32>
    %101 = math.tanh %100 : vector<8x32xf32>
    %102 = vector.extract_strided_slice %87 {offsets = [0, 96], sizes = [8, 32], strides = [1, 1]} : vector<8x128xf32> to vector<8x32xf32>
    %103 = arith.negf %102 : vector<8x32xf32>
    %104 = math.exp %103 : vector<8x32xf32>
    %cst_38 = arith.constant 1.000000e+00 : f32
    %105 = vector.broadcast %cst_38 : f32 to vector<8x32xf32>
    %106 = arith.addf %105, %104 : vector<8x32xf32>
    %107 = arith.divf %105, %106 : vector<8x32xf32>
    %108 = arith.mulf %99, %76 : vector<8x32xf32>
    %109 = arith.mulf %93, %101 : vector<8x32xf32>
    %110 = arith.addf %108, %109 : vector<8x32xf32>
    %111 = math.tanh %110 : vector<8x32xf32>
    %112 = arith.mulf %107, %111 : vector<8x32xf32>
    %113 = arith.index_cast %c2_i32 : i32 to index
    %c0_39 = arith.constant 0 : index
    %c0_40 = arith.constant 0 : index
    %114 = vector.load %arg12[%113, %c0_39, %c0_40] : memref<8x8x32xf32, #tpu.memory_space<vmem>>, vector<1x8x32xf32>
    %115 = vector.shape_cast %114 : vector<1x8x32xf32> to vector<8x32xf32>
    %116 = vector.shape_cast %112 : vector<8x32xf32> to vector<1x8x32xf32>
    tpu.vector_store %arg12[%113, %c0_39, %c0_40], %116 {strides = array<i32>} : memref<8x8x32xf32, #tpu.memory_space<vmem>>, vector<1x8x32xf32>,
    %c3_i32 = arith.constant 3 : i32
    %117 = arith.index_cast %c3_i32 : i32 to index
    %c0_41 = arith.constant 0 : index
    %c0_42 = arith.constant 0 : index
    %118 = vector.load %arg11[%117, %c0_41, %c0_42] : memref<8x8x128xf32, #tpu.memory_space<vmem>>, vector<1x8x128xf32>
    %119 = vector.shape_cast %118 : vector<1x8x128xf32> to vector<8x128xf32>
    %cst_43 = arith.constant dense<0.000000e+00> : vector<8x128xf32>
    %120 = tpu.matmul %112, %12, %cst_43 {dimension_numbers = #tpu.dot_dimension_numbers<[1], [0], [0], [1], [0, 0, 1, 1], [], []>} : vector<8x32xf32>, vector<32x128xf32>, vector<8x128xf32> -> vector<8x128xf32>
    %121 = arith.addf %119, %120 : vector<8x128xf32>
    %122 = vector.extract_strided_slice %121 {offsets = [0, 0], sizes = [8, 32], strides = [1, 1]} : vector<8x128xf32> to vector<8x32xf32>
    %123 = arith.negf %122 : vector<8x32xf32>
    %124 = math.exp %123 : vector<8x32xf32>
    %cst_44 = arith.constant 1.000000e+00 : f32
    %125 = vector.broadcast %cst_44 : f32 to vector<8x32xf32>
    %126 = arith.addf %125, %124 : vector<8x32xf32>
    %127 = arith.divf %125, %126 : vector<8x32xf32>
    %128 = vector.extract_strided_slice %121 {offsets = [0, 32], sizes = [8, 32], strides = [1, 1]} : vector<8x128xf32> to vector<8x32xf32>
    %129 = arith.negf %128 : vector<8x32xf32>
    %130 = math.exp %129 : vector<8x32xf32>
    %cst_45 = arith.constant 1.000000e+00 : f32
    %131 = vector.broadcast %cst_45 : f32 to vector<8x32xf32>
    %132 = arith.addf %131, %130 : vector<8x32xf32>
    %133 = arith.divf %131, %132 : vector<8x32xf32>
    %134 = vector.extract_strided_slice %121 {offsets = [0, 64], sizes = [8, 32], strides = [1, 1]} : vector<8x128xf32> to vector<8x32xf32>
    %135 = math.tanh %134 : vector<8x32xf32>
    %136 = vector.extract_strided_slice %121 {offsets = [0, 96], sizes = [8, 32], strides = [1, 1]} : vector<8x128xf32> to vector<8x32xf32>
    %137 = arith.negf %136 : vector<8x32xf32>
    %138 = math.exp %137 : vector<8x32xf32>
    %cst_46 = arith.constant 1.000000e+00 : f32
    %139 = vector.broadcast %cst_46 : f32 to vector<8x32xf32>
    %140 = arith.addf %139, %138 : vector<8x32xf32>
    %141 = arith.divf %139, %140 : vector<8x32xf32>
    %142 = arith.mulf %133, %110 : vector<8x32xf32>
    %143 = arith.mulf %127, %135 : vector<8x32xf32>
    %144 = arith.addf %142, %143 : vector<8x32xf32>
    %145 = math.tanh %144 : vector<8x32xf32>
    %146 = arith.mulf %141, %145 : vector<8x32xf32>
    %147 = arith.index_cast %c3_i32 : i32 to index
    %c0_47 = arith.constant 0 : index
    %c0_48 = arith.constant 0 : index
    %148 = vector.load %arg12[%147, %c0_47, %c0_48] : memref<8x8x32xf32, #tpu.memory_space<vmem>>, vector<1x8x32xf32>
    %149 = vector.shape_cast %148 : vector<1x8x32xf32> to vector<8x32xf32>
    %150 = vector.shape_cast %146 : vector<8x32xf32> to vector<1x8x32xf32>
    tpu.vector_store %arg12[%147, %c0_47, %c0_48], %150 {strides = array<i32>} : memref<8x8x32xf32, #tpu.memory_space<vmem>>, vector<1x8x32xf32>,
    %c4_i32 = arith.constant 4 : i32
    %151 = arith.index_cast %c4_i32 : i32 to index
    %c0_49 = arith.constant 0 : index
    %c0_50 = arith.constant 0 : index
    %152 = vector.load %arg11[%151, %c0_49, %c0_50] : memref<8x8x128xf32, #tpu.memory_space<vmem>>, vector<1x8x128xf32>
    %153 = vector.shape_cast %152 : vector<1x8x128xf32> to vector<8x128xf32>
    %cst_51 = arith.constant dense<0.000000e+00> : vector<8x128xf32>
    %154 = tpu.matmul %146, %12, %cst_51 {dimension_numbers = #tpu.dot_dimension_numbers<[1], [0], [0], [1], [0, 0, 1, 1], [], []>} : vector<8x32xf32>, vector<32x128xf32>, vector<8x128xf32> -> vector<8x128xf32>
    %155 = arith.addf %153, %154 : vector<8x128xf32>
    %156 = vector.extract_strided_slice %155 {offsets = [0, 0], sizes = [8, 32], strides = [1, 1]} : vector<8x128xf32> to vector<8x32xf32>
    %157 = arith.negf %156 : vector<8x32xf32>
    %158 = math.exp %157 : vector<8x32xf32>
    %cst_52 = arith.constant 1.000000e+00 : f32
    %159 = vector.broadcast %cst_52 : f32 to vector<8x32xf32>
    %160 = arith.addf %159, %158 : vector<8x32xf32>
    %161 = arith.divf %159, %160 : vector<8x32xf32>
    %162 = vector.extract_strided_slice %155 {offsets = [0, 32], sizes = [8, 32], strides = [1, 1]} : vector<8x128xf32> to vector<8x32xf32>
    %163 = arith.negf %162 : vector<8x32xf32>
    %164 = math.exp %163 : vector<8x32xf32>
    %cst_53 = arith.constant 1.000000e+00 : f32
    %165 = vector.broadcast %cst_53 : f32 to vector<8x32xf32>
    %166 = arith.addf %165, %164 : vector<8x32xf32>
    %167 = arith.divf %165, %166 : vector<8x32xf32>
    %168 = vector.extract_strided_slice %155 {offsets = [0, 64], sizes = [8, 32], strides = [1, 1]} : vector<8x128xf32> to vector<8x32xf32>
    %169 = math.tanh %168 : vector<8x32xf32>
    %170 = vector.extract_strided_slice %155 {offsets = [0, 96], sizes = [8, 32], strides = [1, 1]} : vector<8x128xf32> to vector<8x32xf32>
    %171 = arith.negf %170 : vector<8x32xf32>
    %172 = math.exp %171 : vector<8x32xf32>
    %cst_54 = arith.constant 1.000000e+00 : f32
    %173 = vector.broadcast %cst_54 : f32 to vector<8x32xf32>
    %174 = arith.addf %173, %172 : vector<8x32xf32>
    %175 = arith.divf %173, %174 : vector<8x32xf32>
    %176 = arith.mulf %167, %144 : vector<8x32xf32>
    %177 = arith.mulf %161, %169 : vector<8x32xf32>
    %178 = arith.addf %176, %177 : vector<8x32xf32>
    %179 = math.tanh %178 : vector<8x32xf32>
    %180 = arith.mulf %175, %179 : vector<8x32xf32>
    %181 = arith.index_cast %c4_i32 : i32 to index
    %c0_55 = arith.constant 0 : index
    %c0_56 = arith.constant 0 : index
    %182 = vector.load %arg12[%181, %c0_55, %c0_56] : memref<8x8x32xf32, #tpu.memory_space<vmem>>, vector<1x8x32xf32>
    %183 = vector.shape_cast %182 : vector<1x8x32xf32> to vector<8x32xf32>
    %184 = vector.shape_cast %180 : vector<8x32xf32> to vector<1x8x32xf32>
    tpu.vector_store %arg12[%181, %c0_55, %c0_56], %184 {strides = array<i32>} : memref<8x8x32xf32, #tpu.memory_space<vmem>>, vector<1x8x32xf32>,
    %c5_i32 = arith.constant 5 : i32
    %185 = arith.index_cast %c5_i32 : i32 to index
    %c0_57 = arith.constant 0 : index
    %c0_58 = arith.constant 0 : index
    %186 = vector.load %arg11[%185, %c0_57, %c0_58] : memref<8x8x128xf32, #tpu.memory_space<vmem>>, vector<1x8x128xf32>
    %187 = vector.shape_cast %186 : vector<1x8x128xf32> to vector<8x128xf32>
    %cst_59 = arith.constant dense<0.000000e+00> : vector<8x128xf32>
    %188 = tpu.matmul %180, %12, %cst_59 {dimension_numbers = #tpu.dot_dimension_numbers<[1], [0], [0], [1], [0, 0, 1, 1], [], []>} : vector<8x32xf32>, vector<32x128xf32>, vector<8x128xf32> -> vector<8x128xf32>
    %189 = arith.addf %187, %188 : vector<8x128xf32>
    %190 = vector.extract_strided_slice %189 {offsets = [0, 0], sizes = [8, 32], strides = [1, 1]} : vector<8x128xf32> to vector<8x32xf32>
    %191 = arith.negf %190 : vector<8x32xf32>
    %192 = math.exp %191 : vector<8x32xf32>
    %cst_60 = arith.constant 1.000000e+00 : f32
    %193 = vector.broadcast %cst_60 : f32 to vector<8x32xf32>
    %194 = arith.addf %193, %192 : vector<8x32xf32>
    %195 = arith.divf %193, %194 : vector<8x32xf32>
    %196 = vector.extract_strided_slice %189 {offsets = [0, 32], sizes = [8, 32], strides = [1, 1]} : vector<8x128xf32> to vector<8x32xf32>
    %197 = arith.negf %196 : vector<8x32xf32>
    %198 = math.exp %197 : vector<8x32xf32>
    %cst_61 = arith.constant 1.000000e+00 : f32
    %199 = vector.broadcast %cst_61 : f32 to vector<8x32xf32>
    %200 = arith.addf %199, %198 : vector<8x32xf32>
    %201 = arith.divf %199, %200 : vector<8x32xf32>
    %202 = vector.extract_strided_slice %189 {offsets = [0, 64], sizes = [8, 32], strides = [1, 1]} : vector<8x128xf32> to vector<8x32xf32>
    %203 = math.tanh %202 : vector<8x32xf32>
    %204 = vector.extract_strided_slice %189 {offsets = [0, 96], sizes = [8, 32], strides = [1, 1]} : vector<8x128xf32> to vector<8x32xf32>
    %205 = arith.negf %204 : vector<8x32xf32>
    %206 = math.exp %205 : vector<8x32xf32>
    %cst_62 = arith.constant 1.000000e+00 : f32
    %207 = vector.broadcast %cst_62 : f32 to vector<8x32xf32>
    %208 = arith.addf %207, %206 : vector<8x32xf32>
    %209 = arith.divf %207, %208 : vector<8x32xf32>
    %210 = arith.mulf %201, %178 : vector<8x32xf32>
    %211 = arith.mulf %195, %203 : vector<8x32xf32>
    %212 = arith.addf %210, %211 : vector<8x32xf32>
    %213 = math.tanh %212 : vector<8x32xf32>
    %214 = arith.mulf %209, %213 : vector<8x32xf32>
    %215 = arith.index_cast %c5_i32 : i32 to index
    %c0_63 = arith.constant 0 : index
    %c0_64 = arith.constant 0 : index
    %216 = vector.load %arg12[%215, %c0_63, %c0_64] : memref<8x8x32xf32, #tpu.memory_space<vmem>>, vector<1x8x32xf32>
    %217 = vector.shape_cast %216 : vector<1x8x32xf32> to vector<8x32xf32>
    %218 = vector.shape_cast %214 : vector<8x32xf32> to vector<1x8x32xf32>
    tpu.vector_store %arg12[%215, %c0_63, %c0_64], %218 {strides = array<i32>} : memref<8x8x32xf32, #tpu.memory_space<vmem>>, vector<1x8x32xf32>,
    %c6_i32 = arith.constant 6 : i32
    %219 = arith.index_cast %c6_i32 : i32 to index
    %c0_65 = arith.constant 0 : index
    %c0_66 = arith.constant 0 : index
    %220 = vector.load %arg11[%219, %c0_65, %c0_66] : memref<8x8x128xf32, #tpu.memory_space<vmem>>, vector<1x8x128xf32>
    %221 = vector.shape_cast %220 : vector<1x8x128xf32> to vector<8x128xf32>
    %cst_67 = arith.constant dense<0.000000e+00> : vector<8x128xf32>
    %222 = tpu.matmul %214, %12, %cst_67 {dimension_numbers = #tpu.dot_dimension_numbers<[1], [0], [0], [1], [0, 0, 1, 1], [], []>} : vector<8x32xf32>, vector<32x128xf32>, vector<8x128xf32> -> vector<8x128xf32>
    %223 = arith.addf %221, %222 : vector<8x128xf32>
    %224 = vector.extract_strided_slice %223 {offsets = [0, 0], sizes = [8, 32], strides = [1, 1]} : vector<8x128xf32> to vector<8x32xf32>
    %225 = arith.negf %224 : vector<8x32xf32>
    %226 = math.exp %225 : vector<8x32xf32>
    %cst_68 = arith.constant 1.000000e+00 : f32
    %227 = vector.broadcast %cst_68 : f32 to vector<8x32xf32>
    %228 = arith.addf %227, %226 : vector<8x32xf32>
    %229 = arith.divf %227, %228 : vector<8x32xf32>
    %230 = vector.extract_strided_slice %223 {offsets = [0, 32], sizes = [8, 32], strides = [1, 1]} : vector<8x128xf32> to vector<8x32xf32>
    %231 = arith.negf %230 : vector<8x32xf32>
    %232 = math.exp %231 : vector<8x32xf32>
    %cst_69 = arith.constant 1.000000e+00 : f32
    %233 = vector.broadcast %cst_69 : f32 to vector<8x32xf32>
    %234 = arith.addf %233, %232 : vector<8x32xf32>
    %235 = arith.divf %233, %234 : vector<8x32xf32>
    %236 = vector.extract_strided_slice %223 {offsets = [0, 64], sizes = [8, 32], strides = [1, 1]} : vector<8x128xf32> to vector<8x32xf32>
    %237 = math.tanh %236 : vector<8x32xf32>
    %238 = vector.extract_strided_slice %223 {offsets = [0, 96], sizes = [8, 32], strides = [1, 1]} : vector<8x128xf32> to vector<8x32xf32>
    %239 = arith.negf %238 : vector<8x32xf32>
    %240 = math.exp %239 : vector<8x32xf32>
    %cst_70 = arith.constant 1.000000e+00 : f32
    %241 = vector.broadcast %cst_70 : f32 to vector<8x32xf32>
    %242 = arith.addf %241, %240 : vector<8x32xf32>
    %243 = arith.divf %241, %242 : vector<8x32xf32>
    %244 = arith.mulf %235, %212 : vector<8x32xf32>
    %245 = arith.mulf %229, %237 : vector<8x32xf32>
    %246 = arith.addf %244, %245 : vector<8x32xf32>
    %247 = math.tanh %246 : vector<8x32xf32>
    %248 = arith.mulf %243, %247 : vector<8x32xf32>
    %249 = arith.index_cast %c6_i32 : i32 to index
    %c0_71 = arith.constant 0 : index
    %c0_72 = arith.constant 0 : index
    %250 = vector.load %arg12[%249, %c0_71, %c0_72] : memref<8x8x32xf32, #tpu.memory_space<vmem>>, vector<1x8x32xf32>
    %251 = vector.shape_cast %250 : vector<1x8x32xf32> to vector<8x32xf32>
    %252 = vector.shape_cast %248 : vector<8x32xf32> to vector<1x8x32xf32>
    tpu.vector_store %arg12[%249, %c0_71, %c0_72], %252 {strides = array<i32>} : memref<8x8x32xf32, #tpu.memory_space<vmem>>, vector<1x8x32xf32>,
    %c7_i32 = arith.constant 7 : i32
    %253 = arith.index_cast %c7_i32 : i32 to index
    %c0_73 = arith.constant 0 : index
    %c0_74 = arith.constant 0 : index
    %254 = vector.load %arg11[%253, %c0_73, %c0_74] : memref<8x8x128xf32, #tpu.memory_space<vmem>>, vector<1x8x128xf32>
    %255 = vector.shape_cast %254 : vector<1x8x128xf32> to vector<8x128xf32>
    %cst_75 = arith.constant dense<0.000000e+00> : vector<8x128xf32>
    %256 = tpu.matmul %248, %12, %cst_75 {dimension_numbers = #tpu.dot_dimension_numbers<[1], [0], [0], [1], [0, 0, 1, 1], [], []>} : vector<8x32xf32>, vector<32x128xf32>, vector<8x128xf32> -> vector<8x128xf32>
    %257 = arith.addf %255, %256 : vector<8x128xf32>
    %258 = vector.extract_strided_slice %257 {offsets = [0, 0], sizes = [8, 32], strides = [1, 1]} : vector<8x128xf32> to vector<8x32xf32>
    %259 = arith.negf %258 : vector<8x32xf32>
    %260 = math.exp %259 : vector<8x32xf32>
    %cst_76 = arith.constant 1.000000e+00 : f32
    %261 = vector.broadcast %cst_76 : f32 to vector<8x32xf32>
    %262 = arith.addf %261, %260 : vector<8x32xf32>
    %263 = arith.divf %261, %262 : vector<8x32xf32>
    %264 = vector.extract_strided_slice %257 {offsets = [0, 32], sizes = [8, 32], strides = [1, 1]} : vector<8x128xf32> to vector<8x32xf32>
    %265 = arith.negf %264 : vector<8x32xf32>
    %266 = math.exp %265 : vector<8x32xf32>
    %cst_77 = arith.constant 1.000000e+00 : f32
    %267 = vector.broadcast %cst_77 : f32 to vector<8x32xf32>
    %268 = arith.addf %267, %266 : vector<8x32xf32>
    %269 = arith.divf %267, %268 : vector<8x32xf32>
    %270 = vector.extract_strided_slice %257 {offsets = [0, 64], sizes = [8, 32], strides = [1, 1]} : vector<8x128xf32> to vector<8x32xf32>
    %271 = math.tanh %270 : vector<8x32xf32>
    %272 = vector.extract_strided_slice %257 {offsets = [0, 96], sizes = [8, 32], strides = [1, 1]} : vector<8x128xf32> to vector<8x32xf32>
    %273 = arith.negf %272 : vector<8x32xf32>
    %274 = math.exp %273 : vector<8x32xf32>
    %cst_78 = arith.constant 1.000000e+00 : f32
    %275 = vector.broadcast %cst_78 : f32 to vector<8x32xf32>
    %276 = arith.addf %275, %274 : vector<8x32xf32>
    %277 = arith.divf %275, %276 : vector<8x32xf32>
    %278 = arith.mulf %269, %246 : vector<8x32xf32>
    %279 = arith.mulf %263, %271 : vector<8x32xf32>
    %280 = arith.addf %278, %279 : vector<8x32xf32>
    %281 = math.tanh %280 : vector<8x32xf32>
    %282 = arith.mulf %277, %281 : vector<8x32xf32>
    %283 = arith.index_cast %c7_i32 : i32 to index
    %c0_79 = arith.constant 0 : index
    %c0_80 = arith.constant 0 : index
    %284 = vector.load %arg12[%283, %c0_79, %c0_80] : memref<8x8x32xf32, #tpu.memory_space<vmem>>, vector<1x8x32xf32>
    %285 = vector.shape_cast %284 : vector<1x8x32xf32> to vector<8x32xf32>
    %286 = vector.shape_cast %282 : vector<8x32xf32> to vector<1x8x32xf32>
    tpu.vector_store %arg12[%283, %c0_79, %c0_80], %286 {strides = array<i32>} : memref<8x8x32xf32, #tpu.memory_space<vmem>>, vector<1x8x32xf32>,
    %c8_i32 = arith.constant 8 : i32
    %c0_81 = arith.constant 0 : index
    %c0_82 = arith.constant 0 : index
    %287 = vector.load %arg9[%c0_81, %c0_82] : memref<8x32xf32, #tpu.memory_space<vmem>>, vector<8x32xf32>
    tpu.vector_store %arg9[%c0_81, %c0_82], %282 {strides = array<i32>} : memref<8x32xf32, #tpu.memory_space<vmem>>, vector<8x32xf32>,
    %c0_83 = arith.constant 0 : index
    %c0_84 = arith.constant 0 : index
    %288 = vector.load %arg10[%c0_83, %c0_84] : memref<8x32xf32, #tpu.memory_space<vmem>>, vector<8x32xf32>
    tpu.vector_store %arg10[%c0_83, %c0_84], %280 {strides = array<i32>} : memref<8x32xf32, #tpu.memory_space<vmem>>, vector<8x32xf32>,
    %c0_85 = arith.constant 0 : index
    %c0_86 = arith.constant 0 : index
    %c0_87 = arith.constant 0 : index
    %289 = vector.load %arg12[%c0_85, %c0_86, %c0_87] : memref<8x8x32xf32, #tpu.memory_space<vmem>>, vector<8x8x32xf32>
    %290 = vector.shape_cast %289 : vector<8x8x32xf32> to vector<64x32xf32>
    %c0_88 = arith.constant 0 : index
    %c0_89 = arith.constant 0 : index
    %291 = vector.load %arg6[%c0_88, %c0_89] : memref<32x128xf32, #tpu.memory_space<vmem>>, vector<32x128xf32>
    %cst_90 = arith.constant dense<0.000000e+00> : vector<64x128xf32>
    %292 = tpu.matmul %290, %291, %cst_90 {dimension_numbers = #tpu.dot_dimension_numbers<[1], [0], [0], [1], [0, 0, 1, 1], [], []>} : vector<64x32xf32>, vector<32x128xf32>, vector<64x128xf32> -> vector<64x128xf32>
    %c0_91 = arith.constant 0 : index
    %c0_92 = arith.constant 0 : index
    %293 = vector.load %arg7[%c0_91, %c0_92] : memref<1x128xf32, #tpu.memory_space<vmem>>, vector<1x128xf32>
    %294 = vector.broadcast %293 : vector<1x128xf32> to vector<64x128xf32>
    %295 = arith.addf %292, %294 : vector<64x128xf32>
    %296 = vector.shape_cast %295 : vector<64x128xf32> to vector<8x8x128xf32>
    %c0_93 = arith.constant 0 : index
    %c0_94 = arith.constant 0 : index
    %c0_95 = arith.constant 0 : index
    %297 = vector.load %arg8[%c0_93, %c0_94, %c0_95] : memref<8x8x128xf32, #tpu.memory_space<vmem>>, vector<8x8x128xf32>
    tpu.vector_store %arg8[%c0_93, %c0_94, %c0_95], %296 {strides = array<i32>} : memref<8x8x128xf32, #tpu.memory_space<vmem>>, vector<8x8x128xf32>,
    return
  }
  func.func @transform_0(%arg0: i32, %arg1: i32) -> (i32, i32, i32) {
    %c0_i32 = arith.constant 0 : i32
    %c0_i32_0 = arith.constant 0 : i32
    return %arg1, %arg0, %c0_i32 : i32, i32, i32
  }
  func.func @transform_1(%arg0: i32, %arg1: i32) -> (i32, i32) {
    %c0_i32 = arith.constant 0 : i32
    %c0_i32_0 = arith.constant 0 : i32
    %c0_i32_1 = arith.constant 0 : i32
    return %c0_i32, %c0_i32_0 : i32, i32
  }
  func.func @transform_2(%arg0: i32, %arg1: i32) -> (i32, i32) {
    %c0_i32 = arith.constant 0 : i32
    %c0_i32_0 = arith.constant 0 : i32
    %c0_i32_1 = arith.constant 0 : i32
    return %c0_i32, %c0_i32_0 : i32, i32
  }
  func.func @transform_3(%arg0: i32, %arg1: i32) -> (i32, i32) {
    %c0_i32 = arith.constant 0 : i32
    %c0_i32_0 = arith.constant 0 : i32
    %c0_i32_1 = arith.constant 0 : i32
    return %c0_i32, %c0_i32_0 : i32, i32
  }
  func.func @transform_4(%arg0: i32, %arg1: i32) -> (i32, i32) {
    %c0_i32 = arith.constant 0 : i32
    %c0_i32_0 = arith.constant 0 : i32
    %c0_i32_1 = arith.constant 0 : i32
    return %c0_i32, %c0_i32_0 : i32, i32
  }
  func.func @transform_5(%arg0: i32, %arg1: i32) -> (i32, i32) {
    %c0_i32 = arith.constant 0 : i32
    %c0_i32_0 = arith.constant 0 : i32
    %c0_i32_1 = arith.constant 0 : i32
    return %c0_i32, %c0_i32_0 : i32, i32
  }
  func.func @transform_6(%arg0: i32, %arg1: i32) -> (i32, i32, i32) {
    %c0_i32 = arith.constant 0 : i32
    %c0_i32_0 = arith.constant 0 : i32
    return %arg1, %arg0, %c0_i32 : i32, i32, i32
  }
  func.func @transform_7(%arg0: i32, %arg1: i32) -> (i32, i32) {
    %c0_i32 = arith.constant 0 : i32
    %c0_i32_0 = arith.constant 0 : i32
    return %arg0, %c0_i32 : i32, i32
  }
  func.func @transform_8(%arg0: i32, %arg1: i32) -> (i32, i32) {
    %c0_i32 = arith.constant 0 : i32
    %c0_i32_0 = arith.constant 0 : i32
    return %arg0, %c0_i32 : i32, i32
  }
}

</mosaic_0001>

<llo_original>
// kernel: tpu_custom_call.1
$region0: #{tpu_custom_call.1}
  #allocation0 [shape = 'u32[]', space=smem, size = 0x4, offset = 0x4, fixed_abs, tag = 'smem constant byte address 0x4 - core index']
  #allocation1 [shape = 'u32[144,128]{1,0:T(1,128)}', space=vmem, size = 0x12000, scoped, tag = 'internal scratch']
  #allocation2 [shape = 'f32[8,8,128]{2,1,0:T(8,128)}', space=vmem, size = 0x8000, scoped, tag = 'scratch operand']
  #allocation3 [shape = 'f32[8,8,32]{2,1,0:T(8,128)}', space=vmem, size = 0x8000, scoped, tag = 'scratch operand']
  %s0 = inlined_call_operand.vmem [shape: f32[8,8,4], index: 0, kind: input, shape index: {}]
  %s1 = inlined_call_operand.vmem [shape: f32[4,128], index: 1, kind: input, shape index: {}]
  %s2 = inlined_call_operand.vmem [shape: f32[1,128], index: 2, kind: input, shape index: {}]
  %s3 = inlined_call_operand.vmem [shape: f32[32,128], index: 3, kind: input, shape index: {}]
  %s4 = inlined_call_operand.vmem [shape: f32[32,128], index: 4, kind: input, shape index: {}]
  %s5 = inlined_call_operand.vmem [shape: f32[1,128], index: 5, kind: input, shape index: {}]
  %s6 = inlined_call_operand.hbm [shape: f32[8,8,128], index: 6, kind: output, shape index: {0}]
  %s7 = inlined_call_operand.hbm [shape: f32[8,32], index: 7, kind: output, shape index: {1}]
  %s8 = inlined_call_operand.hbm [shape: f32[8,32], index: 8, kind: output, shape index: {2}]
  %9 = xla_tuple %s6, %s7, %s8
  %s10 = sld [smem:[#allocation0]]
  $region54: #{tpu_custom_call.1} parent=0
    _
  %s12 = ssub.s32 1, %s10
  %s13 = scalar_select 0, %s12, %s10
  $region1: #{tpu_custom_call.1} parent=0
    #allocation4 [shape = 'u8[32768]{0}', space=vmem, size = 0x8000, scoped, tag = 'output window, operand 0, single buffered']
    #allocation5 [shape = 's32[1]{0}', space=sflag, size = 0x4, scoped, tag = 'scoped memory for tpu_custom_call.1']
    #allocation6 [shape = 'u8[4096]{0}', space=vmem, size = 0x1000, scoped, tag = 'output window, operand 1, single buffered']
    #allocation7 [shape = 's32[1]{0}', space=sflag, size = 0x4, scoped, tag = 'scoped memory for tpu_custom_call.1']
    #allocation8 [shape = 'u8[4096]{0}', space=vmem, size = 0x1000, scoped, tag = 'output window, operand 2, single buffered']
    %14 = vsyncpa [#allocation5], 0
    %15 = vsyncpa [#allocation7], 0
    // Predicated region
    $region2: #{tpu_custom_call.1} parent=1 // pred_check
      _
    $region3: #{tpu_custom_call.1} parent=1 // pred_check_branch
      %17 = sbr.rel (0) target = $region5
    $region4: #{tpu_custom_call.1} parent=1 // pred_region
      _
    $region5: #{tpu_custom_call.1} parent=1 // pred_fallthru
      _
    // Predicated region
    $region6: #{tpu_custom_call.1} parent=1 // pred_check
      _
    $region7: #{tpu_custom_call.1} parent=1 // pred_check_branch
      %19 = sbr.rel (0) target = $region9
    $region8: #{tpu_custom_call.1} parent=1 // pred_region
      _
    $region9: #{tpu_custom_call.1} parent=1 // pred_fallthru
      _
    // Predicated region
    $region10: #{tpu_custom_call.1} parent=1 // pred_check
      _
    $region11: #{tpu_custom_call.1} parent=1 // pred_check_branch
      %21 = sbr.rel (0) target = $region13
    $region12: #{tpu_custom_call.1} parent=1 // pred_region
      _
    $region13: #{tpu_custom_call.1} parent=1 // pred_fallthru
      _
    // Predicated region
    $region14: #{tpu_custom_call.1} parent=1 // pred_check
      _
    $region15: #{tpu_custom_call.1} parent=1 // pred_check_branch
      %23 = sbr.rel (0) target = $region17
    $region16: #{tpu_custom_call.1} parent=1 // pred_region
      _
    $region17: #{tpu_custom_call.1} parent=1 // pred_fallthru
      _
    // Predicated region
    $region18: #{tpu_custom_call.1} parent=1 // pred_check
      _
    $region19: #{tpu_custom_call.1} parent=1 // pred_check_branch
      %25 = sbr.rel (0) target = $region21
    $region20: #{tpu_custom_call.1} parent=1 // pred_region
      _
    $region21: #{tpu_custom_call.1} parent=1 // pred_fallthru
      _
    // Predicated region
    $region22: #{tpu_custom_call.1} parent=1 // pred_check
      _
    $region23: #{tpu_custom_call.1} parent=1 // pred_check_branch
      %27 = sbr.rel (0) target = $region25
    $region24: #{tpu_custom_call.1} parent=1 // pred_region
      _
    $region25: #{tpu_custom_call.1} parent=1 // pred_fallthru
      _
    %p28 = scmp.eq.s32.totalorder 0, 0
    // Predicated region
    $region26: #{tpu_custom_call.1} parent=1 // pred_check
      %p29 = pneg %p28
    $region27: #{tpu_custom_call.1} parent=1 // pred_check_branch
      %31 = sbr.rel (%p29) target = $region29
    $region28: #{tpu_custom_call.1} parent=1 // pred_region
      %vm32 = vcmask 261120
      %33 = vst.msk [vmem:[#allocation6] sm:$0xff] %vm32, 0.0
      %34 = vst.msk [vmem:[#allocation8] sm:$0xff] %vm32, 0.0
    $region29: #{tpu_custom_call.1} parent=1 // pred_fallthru
      _
    %v35 = vld [vmem:[%s0] sm:$0xff]
    %v36 = vld [vmem:[%s0 + $0x8] sm:$0xff]
    %v37 = vld [vmem:[%s0 + $0x10] sm:$0xff]
    %v38 = vld [vmem:[%s0 + $0x18] sm:$0xff]
    %v39 = vld [vmem:[%s0 + $0x20] sm:$0xff]
    %v40 = vld [vmem:[%s0 + $0x28] sm:$0xff]
    %v41 = vld [vmem:[%s0 + $0x30] sm:$0xff]
    %v42 = vld [vmem:[%s0 + $0x38] sm:$0xff]
    %v43 = vld [vmem:[%s1] sm:$0xf]
    %v44 = vld [vmem:[%s2] sm:$0x1]
    %v46 = vlaneseq
    %v47 = vshrl.u32 %v46, 7
    %v48 = vsub.s32 0, %v47
    %v49 = vrot.slane %v44, %v48
    %vm51 = vcmask 31744
    %v53 = vsel %vm51, %v35, 0
    %v56 = vsel %vm51, %v36, 0
    %v59 = vsel %vm51, %v37, 0
    %v62 = vsel %vm51, %v38, 0
    %v65 = vsel %vm51, %v39, 0
    %v68 = vsel %vm51, %v40, 0
    %v71 = vsel %vm51, %v41, 0
    %v74 = vsel %vm51, %v42, 0
    %vm76 = vcmask 1043456
    %v78 = vsel %vm76, %v43, 0
    %80 = vmatprep.subr.mxu0 0.0
    %81 = vmatpush1.msra.mxu0 0.0
    %82 = vmatprep.subr.mxu0 0.0
    %83 = vmatpush1.msra.mxu0 0.0
    %84 = vmatprep.subr.mxu0 0.0
    %85 = vmatpush1.msra.mxu0 0.0
    %86 = vmatprep.subr.mxu0 0.0
    %87 = vmatpush1.msra.mxu0 0.0
    %88 = vmatprep.subr.mxu0 0.0
    %89 = vmatpush1.msra.mxu0 0.0
    %90 = vmatprep.subr.mxu0 0.0
    %91 = vmatpush1.msra.mxu0 0.0
    %92 = vmatprep.subr.mxu0 0.0
    %93 = vmatpush1.msra.mxu0 0.0
    %94 = vmatprep.subr.mxu0 0.0
    %95 = vmatpush1.msra.mxu0 0.0
    %96 = vmatprep.subr.mxu0 0.0
    %97 = vmatpush1.msra.mxu0 0.0
    %98 = vmatprep.subr.mxu0 0.0
    %99 = vmatpush1.msra.mxu0 0.0
    %100 = vmatprep.subr.mxu0 0.0
    %101 = vmatpush1.msra.mxu0 0.0
    %102 = vmatprep.subr.mxu0 0.0
    %103 = vmatpush1.msra.mxu0 0.0
    %104 = vmatprep.subr.mxu0 0.0
    %105 = vmatpush1.msra.mxu0 0.0
    %106 = vmatprep.subr.mxu0 0.0
    %107 = vmatpush1.msra.mxu0 0.0
    %108 = vmatprep.subr.mxu0 0.0
    %109 = vmatpush1.msra.mxu0 0.0
    %110 = vmatprep.subr.mxu0 0.0
    %111 = vmatpush1.msra.mxu0 %v78
    %112 = vmatprep.subr.mxu0 0.0
    %113 = vmatpush2.msra.mxu0 0.0
    %114 = vmatprep.subr.mxu0 0.0
    %115 = vmatpush2.msra.mxu0 0.0
    %116 = vmatprep.subr.mxu0 0.0
    %117 = vmatpush2.msra.mxu0 0.0
    %118 = vmatprep.subr.mxu0 0.0
    %119 = vmatpush2.msra.mxu0 0.0
    %120 = vmatprep.subr.mxu0 0.0
    %121 = vmatpush2.msra.mxu0 0.0
    %122 = vmatprep.subr.mxu0 0.0
    %123 = vmatpush2.msra.mxu0 0.0
    %124 = vmatprep.subr.mxu0 0.0
    %125 = vmatpush2.msra.mxu0 0.0
    %126 = vmatprep.subr.mxu0 0.0
    %127 = vmatpush2.msra.mxu0 0.0
    %128 = vmatprep.subr.mxu0 0.0
    %129 = vmatpush2.msra.mxu0 0.0
    %130 = vmatprep.subr.mxu0 0.0
    %131 = vmatpush2.msra.mxu0 0.0
    %132 = vmatprep.subr.mxu0 0.0
    %133 = vmatpush2.msra.mxu0 0.0
    %134 = vmatprep.subr.mxu0 0.0
    %135 = vmatpush2.msra.mxu0 0.0
    %136 = vmatprep.subr.mxu0 0.0
    %137 = vmatpush2.msra.mxu0 0.0
    %138 = vmatprep.subr.mxu0 0.0
    %139 = vmatpush2.msra.mxu0 0.0
    %140 = vmatprep.subr.mxu0 0.0
    %141 = vmatpush2.msra.mxu0 0.0
    %142 = vmatprep.subr.mxu0 0.0
    %143 = vmatpush2.msra.mxu0 0.0
    %144 = vmatprep.mubr.f32.mxu0 0.0
    %145 = vmatmul.mubr.f32.gmra.mxu0 %v53
    %v146 = vpop.f32.mrf.mxu0
    %v147 = vadd.f32 %v49, %v146
    %v148 = vpop.f32.mrf.mxu0
    %149 = vmatprep.mubr.f32.mxu0 0.0
    %150 = vmatmul.mubr.f32.gmra.mxu0 %v56
    %v151 = vpop.f32.mrf.mxu0
    %v152 = vadd.f32 %v49, %v151
    %v153 = vpop.f32.mrf.mxu0
    %154 = vmatprep.mubr.f32.mxu0 0.0
    %155 = vmatmul.mubr.f32.gmra.mxu0 %v59
    %v156 = vpop.f32.mrf.mxu0
    %v157 = vadd.f32 %v49, %v156
    %v158 = vpop.f32.mrf.mxu0
    %159 = vmatprep.mubr.f32.mxu0 0.0
    %160 = vmatmul.mubr.f32.gmra.mxu0 %v62
    %v161 = vpop.f32.mrf.mxu0
    %v162 = vadd.f32 %v49, %v161
    %v163 = vpop.f32.mrf.mxu0
    %164 = vmatprep.mubr.f32.mxu0 0.0
    %165 = vmatmul.mubr.f32.gmra.mxu0 %v65
    %v166 = vpop.f32.mrf.mxu0
    %v167 = vadd.f32 %v49, %v166
    %v168 = vpop.f32.mrf.mxu0
    %169 = vmatprep.mubr.f32.mxu0 0.0
    %170 = vmatmul.mubr.f32.gmra.mxu0 %v68
    %v171 = vpop.f32.mrf.mxu0
    %v172 = vadd.f32 %v49, %v171
    %v173 = vpop.f32.mrf.mxu0
    %174 = vmatprep.mubr.f32.mxu0 0.0
    %175 = vmatmul.mubr.f32.gmra.mxu0 %v71
    %v176 = vpop.f32.mrf.mxu0
    %v177 = vadd.f32 %v49, %v176
    %v178 = vpop.f32.mrf.mxu0
    %179 = vmatprep.mubr.f32.mxu0 0.0
    %180 = vmatmul.mubr.f32.gmra.mxu0 %v74
    %v181 = vpop.f32.mrf.mxu0
    %v182 = vadd.f32 %v49, %v181
    %v183 = vpop.f32.mrf.mxu0
    %184 = vdwg.mxu0
    %185 = vst [vmem:[#allocation2] sm:$0xff] %v147
    %186 = vst [vmem:[#allocation2 + $0x8] sm:$0xff] %v152
    %187 = vst [vmem:[#allocation2 + $0x10] sm:$0xff] %v157
    %188 = vst [vmem:[#allocation2 + $0x18] sm:$0xff] %v162
    %189 = vst [vmem:[#allocation2 + $0x20] sm:$0xff] %v167
    %190 = vst [vmem:[#allocation2 + $0x28] sm:$0xff] %v172
    %191 = vst [vmem:[#allocation2 + $0x30] sm:$0xff] %v177
    %192 = vst [vmem:[#allocation2 + $0x38] sm:$0xff] %v182
    %v193 = vld [vmem:[%s3] sm:$0xff]
    %v194 = vld [vmem:[%s3 + $0x8] sm:$0xff]
    %v195 = vld [vmem:[%s3 + $0x10] sm:$0xff]
    %v196 = vld [vmem:[%s3 + $0x18] sm:$0xff]
    %v197 = vld [vmem:[#allocation6] sm:$0xff]
    %v198 = vld [vmem:[#allocation8] sm:$0xff]
    %v199 = vld [vmem:[#allocation2] sm:$0xff]
    %vm200 = vcmask 261120
    %v202 = vsel %vm200, %v197, 0
    %204 = vmatprep.subr.mxu0 0.0
    %205 = vmatpush1.msra.mxu0 0.0
    %206 = vmatprep.subr.mxu0 0.0
    %207 = vmatpush1.msra.mxu0 0.0
    %208 = vmatprep.subr.mxu0 0.0
    %209 = vmatpush1.msra.mxu0 0.0
    %210 = vmatprep.subr.mxu0 0.0
    %211 = vmatpush1.msra.mxu0 0.0
    %212 = vmatprep.subr.mxu0 0.0
    %213 = vmatpush1.msra.mxu0 0.0
    %214 = vmatprep.subr.mxu0 0.0
    %215 = vmatpush1.msra.mxu0 0.0
    %216 = vmatprep.subr.mxu0 0.0
    %217 = vmatpush1.msra.mxu0 0.0
    %218 = vmatprep.subr.mxu0 0.0
    %219 = vmatpush1.msra.mxu0 0.0
    %220 = vmatprep.subr.mxu0 0.0
    %221 = vmatpush1.msra.mxu0 0.0
    %222 = vmatprep.subr.mxu0 0.0
    %223 = vmatpush1.msra.mxu0 0.0
    %224 = vmatprep.subr.mxu0 0.0
    %225 = vmatpush1.msra.mxu0 0.0
    %226 = vmatprep.subr.mxu0 0.0
    %227 = vmatpush1.msra.mxu0 0.0
    %228 = vmatprep.subr.mxu0 0.0
    %229 = vmatpush1.msra.mxu0 %v196
    %230 = vmatprep.subr.mxu0 0.0
    %231 = vmatpush1.msra.mxu0 %v195
    %232 = vmatprep.subr.mxu0 0.0
    %233 = vmatpush1.msra.mxu0 %v194
    %234 = vmatprep.subr.mxu0 0.0
    %235 = vmatpush1.msra.mxu0 %v193
    %236 = vmatprep.subr.mxu0 0.0
    %237 = vmatpush2.msra.mxu0 0.0
    %238 = vmatprep.subr.mxu0 0.0
    %239 = vmatpush2.msra.mxu0 0.0
    %240 = vmatprep.subr.mxu0 0.0
    %241 = vmatpush2.msra.mxu0 0.0
    %242 = vmatprep.subr.mxu0 0.0
    %243 = vmatpush2.msra.mxu0 0.0
    %244 = vmatprep.subr.mxu0 0.0
    %245 = vmatpush2.msra.mxu0 0.0
    %246 = vmatprep.subr.mxu0 0.0
    %247 = vmatpush2.msra.mxu0 0.0
    %248 = vmatprep.subr.mxu0 0.0
    %249 = vmatpush2.msra.mxu0 0.0
    %250 = vmatprep.subr.mxu0 0.0
    %251 = vmatpush2.msra.mxu0 0.0
    %252 = vmatprep.subr.mxu0 0.0
    %253 = vmatpush2.msra.mxu0 0.0
    %254 = vmatprep.subr.mxu0 0.0
    %255 = vmatpush2.msra.mxu0 0.0
    %256 = vmatprep.subr.mxu0 0.0
    %257 = vmatpush2.msra.mxu0 0.0
    %258 = vmatprep.subr.mxu0 0.0
    %259 = vmatpush2.msra.mxu0 0.0
    %260 = vmatprep.subr.mxu0 0.0
    %261 = vmatpush2.msra.mxu0 0.0
    %262 = vmatprep.subr.mxu0 0.0
    %263 = vmatpush2.msra.mxu0 0.0
    %264 = vmatprep.subr.mxu0 0.0
    %265 = vmatpush2.msra.mxu0 0.0
    %266 = vmatprep.subr.mxu0 0.0
    %267 = vmatpush2.msra.mxu0 0.0
    %268 = vmatprep.mubr.f32.mxu0 0.0
    %269 = vmatmul.mubr.f32.gmra.mxu0 %v202
    %v270 = vpop.f32.mrf.mxu0
    %v271 = vadd.f32 0.0, %v270
    %v272 = vpop.f32.mrf.mxu0
    %273 = vdwg.mxu0
    %v274 = vadd.f32 %v199, %v271
    %v275 = vxor.u32 %v274, 2147483648
    %v276 = vmul.f32 %v275, 1.442695
    %v277 = vpow.pop %v276
    %v278 = vadd.f32 %v277, 1.0
    %v279 = vrcp.pop %v278
    %v280 = vmul.f32 1.0, %v279
    %v281 = vtanh.pop %v274
    %283 = vrot.lane.b32.xlu0 %v198, 32
    %v284 = vpop.permute.xlu0 %283
    %v286 = vmul.f32 %v280, %v284
    %288 = vrot.lane.b32.xlu0 %v281, 64
    %v289 = vpop.permute.xlu0 %288
    %v291 = vmul.f32 %v280, %v289
    %293 = vrot.lane.b32.xlu0 %v291, 32
    %v294 = vpop.permute.xlu0 %293
    %v296 = vadd.f32 %v286, %v294
    %v297 = vtanh.pop %v296
    %299 = vrot.lane.b32.xlu0 %v297, 64
    %v300 = vpop.permute.xlu0 %299
    %v302 = vmul.f32 %v280, %v300
    %304 = vrot.lane.b32.xlu0 %v302, 32
    %v305 = vpop.permute.xlu0 %304
    %307 = vst.msk [vmem:[#allocation3] sm:$0xff] %vm200, %v305
    %s308 = scalar_lea.vmem [#allocation2], 8
    %v309 = vld [vmem:[%s308] sm:$0xff]
    %v310 = vsel %vm200, %v305, 0
    %312 = vmatprep.subr.mxu0 0.0
    %313 = vmatpush1.msra.mxu0 0.0
    %314 = vmatprep.subr.mxu0 0.0
    %315 = vmatpush1.msra.mxu0 0.0
    %316 = vmatprep.subr.mxu0 0.0
    %317 = vmatpush1.msra.mxu0 0.0
    %318 = vmatprep.subr.mxu0 0.0
    %319 = vmatpush1.msra.mxu0 0.0
    %320 = vmatprep.subr.mxu0 0.0
    %321 = vmatpush1.msra.mxu0 0.0
    %322 = vmatprep.subr.mxu0 0.0
    %323 = vmatpush1.msra.mxu0 0.0
    %324 = vmatprep.subr.mxu0 0.0
    %325 = vmatpush1.msra.mxu0 0.0
    %326 = vmatprep.subr.mxu0 0.0
    %327 = vmatpush1.msra.mxu0 0.0
    %328 = vmatprep.subr.mxu0 0.0
    %329 = vmatpush1.msra.mxu0 0.0
    %330 = vmatprep.subr.mxu0 0.0
    %331 = vmatpush1.msra.mxu0 0.0
    %332 = vmatprep.subr.mxu0 0.0
    %333 = vmatpush1.msra.mxu0 0.0
    %334 = vmatprep.subr.mxu0 0.0
    %335 = vmatpush1.msra.mxu0 0.0
    %336 = vmatprep.subr.mxu0 0.0
    %337 = vmatpush1.msra.mxu0 %v196
    %338 = vmatprep.subr.mxu0 0.0
    %339 = vmatpush1.msra.mxu0 %v195
    %340 = vmatprep.subr.mxu0 0.0
    %341 = vmatpush1.msra.mxu0 %v194
    %342 = vmatprep.subr.mxu0 0.0
    %343 = vmatpush1.msra.mxu0 %v193
    %344 = vmatprep.subr.mxu0 0.0
    %345 = vmatpush2.msra.mxu0 0.0
    %346 = vmatprep.subr.mxu0 0.0
    %347 = vmatpush2.msra.mxu0 0.0
    %348 = vmatprep.subr.mxu0 0.0
    %349 = vmatpush2.msra.mxu0 0.0
    %350 = vmatprep.subr.mxu0 0.0
    %351 = vmatpush2.msra.mxu0 0.0
    %352 = vmatprep.subr.mxu0 0.0
    %353 = vmatpush2.msra.mxu0 0.0
    %354 = vmatprep.subr.mxu0 0.0
    %355 = vmatpush2.msra.mxu0 0.0
    %356 = vmatprep.subr.mxu0 0.0
    %357 = vmatpush2.msra.mxu0 0.0
    %358 = vmatprep.subr.mxu0 0.0
    %359 = vmatpush2.msra.mxu0 0.0
    %360 = vmatprep.subr.mxu0 0.0
    %361 = vmatpush2.msra.mxu0 0.0
    %362 = vmatprep.subr.mxu0 0.0
    %363 = vmatpush2.msra.mxu0 0.0
    %364 = vmatprep.subr.mxu0 0.0
    %365 = vmatpush2.msra.mxu0 0.0
    %366 = vmatprep.subr.mxu0 0.0
    %367 = vmatpush2.msra.mxu0 0.0
    %368 = vmatprep.subr.mxu0 0.0
    %369 = vmatpush2.msra.mxu0 0.0
    %370 = vmatprep.subr.mxu0 0.0
    %371 = vmatpush2.msra.mxu0 0.0
    %372 = vmatprep.subr.mxu0 0.0
    %373 = vmatpush2.msra.mxu0 0.0
    %374 = vmatprep.subr.mxu0 0.0
    %375 = vmatpush2.msra.mxu0 0.0
    %376 = vmatprep.mubr.f32.mxu0 0.0
    %377 = vmatmul.mubr.f32.gmra.mxu0 %v310
    %v378 = vpop.f32.mrf.mxu0
    %v379 = vadd.f32 0.0, %v378
    %v380 = vpop.f32.mrf.mxu0
    %381 = vdwg.mxu0
    %v382 = vadd.f32 %v309, %v379
    %v383 = vxor.u32 %v382, 2147483648
    %v384 = vmul.f32 %v383, 1.442695
    %v385 = vpow.pop %v384
    %v386 = vadd.f32 %v385, 1.0
    %v387 = vrcp.pop %v386
    %v388 = vmul.f32 1.0, %v387
    %v389 = vtanh.pop %v382
    %v390 = vmul.f32 %v388, %v296
    %392 = vrot.lane.b32.xlu0 %v389, 64
    %v393 = vpop.permute.xlu0 %392
    %v395 = vmul.f32 %v388, %v393
    %397 = vrot.lane.b32.xlu0 %v395, 32
    %v398 = vpop.permute.xlu0 %397
    %v400 = vadd.f32 %v390, %v398
    %v401 = vtanh.pop %v400
    %403 = vrot.lane.b32.xlu0 %v401, 64
    %v404 = vpop.permute.xlu0 %403
    %v406 = vmul.f32 %v388, %v404
    %408 = vrot.lane.b32.xlu0 %v406, 32
    %v409 = vpop.permute.xlu0 %408
    %s411 = scalar_lea.vmem [#allocation3], 8
    %412 = vst.msk [vmem:[%s411] sm:$0xff] %vm200, %v409
    %s413 = scalar_lea.vmem [#allocation2], 16
    %v414 = vld [vmem:[%s413] sm:$0xff]
    %v415 = vsel %vm200, %v409, 0
    %417 = vmatprep.subr.mxu0 0.0
    %418 = vmatpush1.msra.mxu0 0.0
    %419 = vmatprep.subr.mxu0 0.0
    %420 = vmatpush1.msra.mxu0 0.0
    %421 = vmatprep.subr.mxu0 0.0
    %422 = vmatpush1.msra.mxu0 0.0
    %423 = vmatprep.subr.mxu0 0.0
    %424 = vmatpush1.msra.mxu0 0.0
    %425 = vmatprep.subr.mxu0 0.0
    %426 = vmatpush1.msra.mxu0 0.0
    %427 = vmatprep.subr.mxu0 0.0
    %428 = vmatpush1.msra.mxu0 0.0
    %429 = vmatprep.subr.mxu0 0.0
    %430 = vmatpush1.msra.mxu0 0.0
    %431 = vmatprep.subr.mxu0 0.0
    %432 = vmatpush1.msra.mxu0 0.0
    %433 = vmatprep.subr.mxu0 0.0
    %434 = vmatpush1.msra.mxu0 0.0
    %435 = vmatprep.subr.mxu0 0.0
    %436 = vmatpush1.msra.mxu0 0.0
    %437 = vmatprep.subr.mxu0 0.0
    %438 = vmatpush1.msra.mxu0 0.0
    %439 = vmatprep.subr.mxu0 0.0
    %440 = vmatpush1.msra.mxu0 0.0
    %441 = vmatprep.subr.mxu0 0.0
    %442 = vmatpush1.msra.mxu0 %v196
    %443 = vmatprep.subr.mxu0 0.0
    %444 = vmatpush1.msra.mxu0 %v195
    %445 = vmatprep.subr.mxu0 0.0
    %446 = vmatpush1.msra.mxu0 %v194
    %447 = vmatprep.subr.mxu0 0.0
    %448 = vmatpush1.msra.mxu0 %v193
    %449 = vmatprep.subr.mxu0 0.0
    %450 = vmatpush2.msra.mxu0 0.0
    %451 = vmatprep.subr.mxu0 0.0
    %452 = vmatpush2.msra.mxu0 0.0
    %453 = vmatprep.subr.mxu0 0.0
    %454 = vmatpush2.msra.mxu0 0.0
    %455 = vmatprep.subr.mxu0 0.0
    %456 = vmatpush2.msra.mxu0 0.0
    %457 = vmatprep.subr.mxu0 0.0
    %458 = vmatpush2.msra.mxu0 0.0
    %459 = vmatprep.subr.mxu0 0.0
    %460 = vmatpush2.msra.mxu0 0.0
    %461 = vmatprep.subr.mxu0 0.0
    %462 = vmatpush2.msra.mxu0 0.0
    %463 = vmatprep.subr.mxu0 0.0
    %464 = vmatpush2.msra.mxu0 0.0
    %465 = vmatprep.subr.mxu0 0.0
    %466 = vmatpush2.msra.mxu0 0.0
    %467 = vmatprep.subr.mxu0 0.0
    %468 = vmatpush2.msra.mxu0 0.0
    %469 = vmatprep.subr.mxu0 0.0
    %470 = vmatpush2.msra.mxu0 0.0
    %471 = vmatprep.subr.mxu0 0.0
    %472 = vmatpush2.msra.mxu0 0.0
    %473 = vmatprep.subr.mxu0 0.0
    %474 = vmatpush2.msra.mxu0 0.0
    %475 = vmatprep.subr.mxu0 0.0
    %476 = vmatpush2.msra.mxu0 0.0
    %477 = vmatprep.subr.mxu0 0.0
    %478 = vmatpush2.msra.mxu0 0.0
    %479 = vmatprep.subr.mxu0 0.0
    %480 = vmatpush2.msra.mxu0 0.0
    %481 = vmatprep.mubr.f32.mxu0 0.0
    %482 = vmatmul.mubr.f32.gmra.mxu0 %v415
    %v483 = vpop.f32.mrf.mxu0
    %v484 = vadd.f32 0.0, %v483
    %v485 = vpop.f32.mrf.mxu0
    %486 = vdwg.mxu0
    %v487 = vadd.f32 %v414, %v484
    %v488 = vxor.u32 %v487, 2147483648
    %v489 = vmul.f32 %v488, 1.442695
    %v490 = vpow.pop %v489
    %v491 = vadd.f32 %v490, 1.0
    %v492 = vrcp.pop %v491
    %v493 = vmul.f32 1.0, %v492
    %v494 = vtanh.pop %v487
    %v495 = vmul.f32 %v493, %v400
    %497 = vrot.lane.b32.xlu0 %v494, 64
    %v498 = vpop.permute.xlu0 %497
    %v500 = vmul.f32 %v493, %v498
    %502 = vrot.lane.b32.xlu0 %v500, 32
    %v503 = vpop.permute.xlu0 %502
    %v505 = vadd.f32 %v495, %v503
    %v506 = vtanh.pop %v505
    %508 = vrot.lane.b32.xlu0 %v506, 64
    %v509 = vpop.permute.xlu0 %508
    %v511 = vmul.f32 %v493, %v509
    %513 = vrot.lane.b32.xlu0 %v511, 32
    %v514 = vpop.permute.xlu0 %513
    %s516 = scalar_lea.vmem [#allocation3], 16
    %517 = vst.msk [vmem:[%s516] sm:$0xff] %vm200, %v514
    %s518 = scalar_lea.vmem [#allocation2], 24
    %v519 = vld [vmem:[%s518] sm:$0xff]
    %v520 = vsel %vm200, %v514, 0
    %522 = vmatprep.subr.mxu0 0.0
    %523 = vmatpush1.msra.mxu0 0.0
    %524 = vmatprep.subr.mxu0 0.0
    %525 = vmatpush1.msra.mxu0 0.0
    %526 = vmatprep.subr.mxu0 0.0
    %527 = vmatpush1.msra.mxu0 0.0
    %528 = vmatprep.subr.mxu0 0.0
    %529 = vmatpush1.msra.mxu0 0.0
    %530 = vmatprep.subr.mxu0 0.0
    %531 = vmatpush1.msra.mxu0 0.0
    %532 = vmatprep.subr.mxu0 0.0
    %533 = vmatpush1.msra.mxu0 0.0
    %534 = vmatprep.subr.mxu0 0.0
    %535 = vmatpush1.msra.mxu0 0.0
    %536 = vmatprep.subr.mxu0 0.0
    %537 = vmatpush1.msra.mxu0 0.0
    %538 = vmatprep.subr.mxu0 0.0
    %539 = vmatpush1.msra.mxu0 0.0
    %540 = vmatprep.subr.mxu0 0.0
    %541 = vmatpush1.msra.mxu0 0.0
    %542 = vmatprep.subr.mxu0 0.0
    %543 = vmatpush1.msra.mxu0 0.0
    %544 = vmatprep.subr.mxu0 0.0
    %545 = vmatpush1.msra.mxu0 0.0
    %546 = vmatprep.subr.mxu0 0.0
    %547 = vmatpush1.msra.mxu0 %v196
    %548 = vmatprep.subr.mxu0 0.0
    %549 = vmatpush1.msra.mxu0 %v195
    %550 = vmatprep.subr.mxu0 0.0
    %551 = vmatpush1.msra.mxu0 %v194
    %552 = vmatprep.subr.mxu0 0.0
    %553 = vmatpush1.msra.mxu0 %v193
    %554 = vmatprep.subr.mxu0 0.0
    %555 = vmatpush2.msra.mxu0 0.0
    %556 = vmatprep.subr.mxu0 0.0
    %557 = vmatpush2.msra.mxu0 0.0
    %558 = vmatprep.subr.mxu0 0.0
    %559 = vmatpush2.msra.mxu0 0.0
    %560 = vmatprep.subr.mxu0 0.0
    %561 = vmatpush2.msra.mxu0 0.0
    %562 = vmatprep.subr.mxu0 0.0
    %563 = vmatpush2.msra.mxu0 0.0
    %564 = vmatprep.subr.mxu0 0.0
    %565 = vmatpush2.msra.mxu0 0.0
    %566 = vmatprep.subr.mxu0 0.0
    %567 = vmatpush2.msra.mxu0 0.0
    %568 = vmatprep.subr.mxu0 0.0
    %569 = vmatpush2.msra.mxu0 0.0
    %570 = vmatprep.subr.mxu0 0.0
    %571 = vmatpush2.msra.mxu0 0.0
    %572 = vmatprep.subr.mxu0 0.0
    %573 = vmatpush2.msra.mxu0 0.0
    %574 = vmatprep.subr.mxu0 0.0
    %575 = vmatpush2.msra.mxu0 0.0
    %576 = vmatprep.subr.mxu0 0.0
    %577 = vmatpush2.msra.mxu0 0.0
    %578 = vmatprep.subr.mxu0 0.0
    %579 = vmatpush2.msra.mxu0 0.0
    %580 = vmatprep.subr.mxu0 0.0
    %581 = vmatpush2.msra.mxu0 0.0
    %582 = vmatprep.subr.mxu0 0.0
    %583 = vmatpush2.msra.mxu0 0.0
    %584 = vmatprep.subr.mxu0 0.0
    %585 = vmatpush2.msra.mxu0 0.0
    %586 = vmatprep.mubr.f32.mxu0 0.0
    %587 = vmatmul.mubr.f32.gmra.mxu0 %v520
    %v588 = vpop.f32.mrf.mxu0
    %v589 = vadd.f32 0.0, %v588
    %v590 = vpop.f32.mrf.mxu0
    %591 = vdwg.mxu0
    %v592 = vadd.f32 %v519, %v589
    %v593 = vxor.u32 %v592, 2147483648
    %v594 = vmul.f32 %v593, 1.442695
    %v595 = vpow.pop %v594
    %v596 = vadd.f32 %v595, 1.0
    %v597 = vrcp.pop %v596
    %v598 = vmul.f32 1.0, %v597
    %v599 = vtanh.pop %v592
    %v600 = vmul.f32 %v598, %v505
    %602 = vrot.lane.b32.xlu0 %v599, 64
    %v603 = vpop.permute.xlu0 %602
    %v605 = vmul.f32 %v598, %v603
    %607 = vrot.lane.b32.xlu0 %v605, 32
    %v608 = vpop.permute.xlu0 %607
    %v610 = vadd.f32 %v600, %v608
    %v611 = vtanh.pop %v610
    %613 = vrot.lane.b32.xlu0 %v611, 64
    %v614 = vpop.permute.xlu0 %613
    %v616 = vmul.f32 %v598, %v614
    %618 = vrot.lane.b32.xlu0 %v616, 32
    %v619 = vpop.permute.xlu0 %618
    %s621 = scalar_lea.vmem [#allocation3], 24
    %622 = vst.msk [vmem:[%s621] sm:$0xff] %vm200, %v619
    %s623 = scalar_lea.vmem [#allocation2], 32
    %v624 = vld [vmem:[%s623] sm:$0xff]
    %v625 = vsel %vm200, %v619, 0
    %627 = vmatprep.subr.mxu0 0.0
    %628 = vmatpush1.msra.mxu0 0.0
    %629 = vmatprep.subr.mxu0 0.0
    %630 = vmatpush1.msra.mxu0 0.0
    %631 = vmatprep.subr.mxu0 0.0
    %632 = vmatpush1.msra.mxu0 0.0
    %633 = vmatprep.subr.mxu0 0.0
    %634 = vmatpush1.msra.mxu0 0.0
    %635 = vmatprep.subr.mxu0 0.0
    %636 = vmatpush1.msra.mxu0 0.0
    %637 = vmatprep.subr.mxu0 0.0
    %638 = vmatpush1.msra.mxu0 0.0
    %639 = vmatprep.subr.mxu0 0.0
    %640 = vmatpush1.msra.mxu0 0.0
    %641 = vmatprep.subr.mxu0 0.0
    %642 = vmatpush1.msra.mxu0 0.0
    %643 = vmatprep.subr.mxu0 0.0
    %644 = vmatpush1.msra.mxu0 0.0
    %645 = vmatprep.subr.mxu0 0.0
    %646 = vmatpush1.msra.mxu0 0.0
    %647 = vmatprep.subr.mxu0 0.0
    %648 = vmatpush1.msra.mxu0 0.0
    %649 = vmatprep.subr.mxu0 0.0
    %650 = vmatpush1.msra.mxu0 0.0
    %651 = vmatprep.subr.mxu0 0.0
    %652 = vmatpush1.msra.mxu0 %v196
    %653 = vmatprep.subr.mxu0 0.0
    %654 = vmatpush1.msra.mxu0 %v195
    %655 = vmatprep.subr.mxu0 0.0
    %656 = vmatpush1.msra.mxu0 %v194
    %657 = vmatprep.subr.mxu0 0.0
    %658 = vmatpush1.msra.mxu0 %v193
    %659 = vmatprep.subr.mxu0 0.0
    %660 = vmatpush2.msra.mxu0 0.0
    %661 = vmatprep.subr.mxu0 0.0
    %662 = vmatpush2.msra.mxu0 0.0
    %663 = vmatprep.subr.mxu0 0.0
    %664 = vmatpush2.msra.mxu0 0.0
    %665 = vmatprep.subr.mxu0 0.0
    %666 = vmatpush2.msra.mxu0 0.0
    %667 = vmatprep.subr.mxu0 0.0
    %668 = vmatpush2.msra.mxu0 0.0
    %669 = vmatprep.subr.mxu0 0.0
    %670 = vmatpush2.msra.mxu0 0.0
    %671 = vmatprep.subr.mxu0 0.0
    %672 = vmatpush2.msra.mxu0 0.0
    %673 = vmatprep.subr.mxu0 0.0
    %674 = vmatpush2.msra.mxu0 0.0
    %675 = vmatprep.subr.mxu0 0.0
    %676 = vmatpush2.msra.mxu0 0.0
    %677 = vmatprep.subr.mxu0 0.0
    %678 = vmatpush2.msra.mxu0 0.0
    %679 = vmatprep.subr.mxu0 0.0
    %680 = vmatpush2.msra.mxu0 0.0
    %681 = vmatprep.subr.mxu0 0.0
    %682 = vmatpush2.msra.mxu0 0.0
    %683 = vmatprep.subr.mxu0 0.0
    %684 = vmatpush2.msra.mxu0 0.0
    %685 = vmatprep.subr.mxu0 0.0
    %686 = vmatpush2.msra.mxu0 0.0
    %687 = vmatprep.subr.mxu0 0.0
    %688 = vmatpush2.msra.mxu0 0.0
    %689 = vmatprep.subr.mxu0 0.0
    %690 = vmatpush2.msra.mxu0 0.0
    %691 = vmatprep.mubr.f32.mxu0 0.0
    %692 = vmatmul.mubr.f32.gmra.mxu0 %v625
    %v693 = vpop.f32.mrf.mxu0
    %v694 = vadd.f32 0.0, %v693
    %v695 = vpop.f32.mrf.mxu0
    %696 = vdwg.mxu0
    %v697 = vadd.f32 %v624, %v694
    %v698 = vxor.u32 %v697, 2147483648
    %v699 = vmul.f32 %v698, 1.442695
    %v700 = vpow.pop %v699
    %v701 = vadd.f32 %v700, 1.0
    %v702 = vrcp.pop %v701
    %v703 = vmul.f32 1.0, %v702
    %v704 = vtanh.pop %v697
    %v705 = vmul.f32 %v703, %v610
    %707 = vrot.lane.b32.xlu0 %v704, 64
    %v708 = vpop.permute.xlu0 %707
    %v710 = vmul.f32 %v703, %v708
    %712 = vrot.lane.b32.xlu0 %v710, 32
    %v713 = vpop.permute.xlu0 %712
    %v715 = vadd.f32 %v705, %v713
    %v716 = vtanh.pop %v715
    %718 = vrot.lane.b32.xlu0 %v716, 64
    %v719 = vpop.permute.xlu0 %718
    %v721 = vmul.f32 %v703, %v719
    %723 = vrot.lane.b32.xlu0 %v721, 32
    %v724 = vpop.permute.xlu0 %723
    %s726 = scalar_lea.vmem [#allocation3], 32
    %727 = vst.msk [vmem:[%s726] sm:$0xff] %vm200, %v724
    %s728 = scalar_lea.vmem [#allocation2], 40
    %v729 = vld [vmem:[%s728] sm:$0xff]
    %v730 = vsel %vm200, %v724, 0
    %732 = vmatprep.subr.mxu0 0.0
    %733 = vmatpush1.msra.mxu0 0.0
    %734 = vmatprep.subr.mxu0 0.0
    %735 = vmatpush1.msra.mxu0 0.0
    %736 = vmatprep.subr.mxu0 0.0
    %737 = vmatpush1.msra.mxu0 0.0
    %738 = vmatprep.subr.mxu0 0.0
    %739 = vmatpush1.msra.mxu0 0.0
    %740 = vmatprep.subr.mxu0 0.0
    %741 = vmatpush1.msra.mxu0 0.0
    %742 = vmatprep.subr.mxu0 0.0
    %743 = vmatpush1.msra.mxu0 0.0
    %744 = vmatprep.subr.mxu0 0.0
    %745 = vmatpush1.msra.mxu0 0.0
    %746 = vmatprep.subr.mxu0 0.0
    %747 = vmatpush1.msra.mxu0 0.0
    %748 = vmatprep.subr.mxu0 0.0
    %749 = vmatpush1.msra.mxu0 0.0
    %750 = vmatprep.subr.mxu0 0.0
    %751 = vmatpush1.msra.mxu0 0.0
    %752 = vmatprep.subr.mxu0 0.0
    %753 = vmatpush1.msra.mxu0 0.0
    %754 = vmatprep.subr.mxu0 0.0
    %755 = vmatpush1.msra.mxu0 0.0
    %756 = vmatprep.subr.mxu0 0.0
    %757 = vmatpush1.msra.mxu0 %v196
    %758 = vmatprep.subr.mxu0 0.0
    %759 = vmatpush1.msra.mxu0 %v195
    %760 = vmatprep.subr.mxu0 0.0
    %761 = vmatpush1.msra.mxu0 %v194
    %762 = vmatprep.subr.mxu0 0.0
    %763 = vmatpush1.msra.mxu0 %v193
    %764 = vmatprep.subr.mxu0 0.0
    %765 = vmatpush2.msra.mxu0 0.0
    %766 = vmatprep.subr.mxu0 0.0
    %767 = vmatpush2.msra.mxu0 0.0
    %768 = vmatprep.subr.mxu0 0.0
    %769 = vmatpush2.msra.mxu0 0.0
    %770 = vmatprep.subr.mxu0 0.0
    %771 = vmatpush2.msra.mxu0 0.0
    %772 = vmatprep.subr.mxu0 0.0
    %773 = vmatpush2.msra.mxu0 0.0
    %774 = vmatprep.subr.mxu0 0.0
    %775 = vmatpush2.msra.mxu0 0.0
    %776 = vmatprep.subr.mxu0 0.0
    %777 = vmatpush2.msra.mxu0 0.0
    %778 = vmatprep.subr.mxu0 0.0
    %779 = vmatpush2.msra.mxu0 0.0
    %780 = vmatprep.subr.mxu0 0.0
    %781 = vmatpush2.msra.mxu0 0.0
    %782 = vmatprep.subr.mxu0 0.0
    %783 = vmatpush2.msra.mxu0 0.0
    %784 = vmatprep.subr.mxu0 0.0
    %785 = vmatpush2.msra.mxu0 0.0
    %786 = vmatprep.subr.mxu0 0.0
    %787 = vmatpush2.msra.mxu0 0.0
    %788 = vmatprep.subr.mxu0 0.0
    %789 = vmatpush2.msra.mxu0 0.0
    %790 = vmatprep.subr.mxu0 0.0
    %791 = vmatpush2.msra.mxu0 0.0
    %792 = vmatprep.subr.mxu0 0.0
    %793 = vmatpush2.msra.mxu0 0.0
    %794 = vmatprep.subr.mxu0 0.0
    %795 = vmatpush2.msra.mxu0 0.0
    %796 = vmatprep.mubr.f32.mxu0 0.0
    %797 = vmatmul.mubr.f32.gmra.mxu0 %v730
    %v798 = vpop.f32.mrf.mxu0
    %v799 = vadd.f32 0.0, %v798
    %v800 = vpop.f32.mrf.mxu0
    %801 = vdwg.mxu0
    %v802 = vadd.f32 %v729, %v799
    %v803 = vxor.u32 %v802, 2147483648
    %v804 = vmul.f32 %v803, 1.442695
    %v805 = vpow.pop %v804
    %v806 = vadd.f32 %v805, 1.0
    %v807 = vrcp.pop %v806
    %v808 = vmul.f32 1.0, %v807
    %v809 = vtanh.pop %v802
    %v810 = vmul.f32 %v808, %v715
    %812 = vrot.lane.b32.xlu0 %v809, 64
    %v813 = vpop.permute.xlu0 %812
    %v815 = vmul.f32 %v808, %v813
    %817 = vrot.lane.b32.xlu0 %v815, 32
    %v818 = vpop.permute.xlu0 %817
    %v820 = vadd.f32 %v810, %v818
    %v821 = vtanh.pop %v820
    %823 = vrot.lane.b32.xlu0 %v821, 64
    %v824 = vpop.permute.xlu0 %823
    %v826 = vmul.f32 %v808, %v824
    %828 = vrot.lane.b32.xlu0 %v826, 32
    %v829 = vpop.permute.xlu0 %828
    %s831 = scalar_lea.vmem [#allocation3], 40
    %832 = vst.msk [vmem:[%s831] sm:$0xff] %vm200, %v829
    %s833 = scalar_lea.vmem [#allocation2], 48
    %v834 = vld [vmem:[%s833] sm:$0xff]
    %v835 = vsel %vm200, %v829, 0
    %837 = vmatprep.subr.mxu0 0.0
    %838 = vmatpush1.msra.mxu0 0.0
    %839 = vmatprep.subr.mxu0 0.0
    %840 = vmatpush1.msra.mxu0 0.0
    %841 = vmatprep.subr.mxu0 0.0
    %842 = vmatpush1.msra.mxu0 0.0
    %843 = vmatprep.subr.mxu0 0.0
    %844 = vmatpush1.msra.mxu0 0.0
    %845 = vmatprep.subr.mxu0 0.0
    %846 = vmatpush1.msra.mxu0 0.0
    %847 = vmatprep.subr.mxu0 0.0
    %848 = vmatpush1.msra.mxu0 0.0
    %849 = vmatprep.subr.mxu0 0.0
    %850 = vmatpush1.msra.mxu0 0.0
    %851 = vmatprep.subr.mxu0 0.0
    %852 = vmatpush1.msra.mxu0 0.0
    %853 = vmatprep.subr.mxu0 0.0
    %854 = vmatpush1.msra.mxu0 0.0
    %855 = vmatprep.subr.mxu0 0.0
    %856 = vmatpush1.msra.mxu0 0.0
    %857 = vmatprep.subr.mxu0 0.0
    %858 = vmatpush1.msra.mxu0 0.0
    %859 = vmatprep.subr.mxu0 0.0
    %860 = vmatpush1.msra.mxu0 0.0
    %861 = vmatprep.subr.mxu0 0.0
    %862 = vmatpush1.msra.mxu0 %v196
    %863 = vmatprep.subr.mxu0 0.0
    %864 = vmatpush1.msra.mxu0 %v195
    %865 = vmatprep.subr.mxu0 0.0
    %866 = vmatpush1.msra.mxu0 %v194
    %867 = vmatprep.subr.mxu0 0.0
    %868 = vmatpush1.msra.mxu0 %v193
    %869 = vmatprep.subr.mxu0 0.0
    %870 = vmatpush2.msra.mxu0 0.0
    %871 = vmatprep.subr.mxu0 0.0
    %872 = vmatpush2.msra.mxu0 0.0
    %873 = vmatprep.subr.mxu0 0.0
    %874 = vmatpush2.msra.mxu0 0.0
    %875 = vmatprep.subr.mxu0 0.0
    %876 = vmatpush2.msra.mxu0 0.0
    %877 = vmatprep.subr.mxu0 0.0
    %878 = vmatpush2.msra.mxu0 0.0
    %879 = vmatprep.subr.mxu0 0.0
    %880 = vmatpush2.msra.mxu0 0.0
    %881 = vmatprep.subr.mxu0 0.0
    %882 = vmatpush2.msra.mxu0 0.0
    %883 = vmatprep.subr.mxu0 0.0
    %884 = vmatpush2.msra.mxu0 0.0
    %885 = vmatprep.subr.mxu0 0.0
    %886 = vmatpush2.msra.mxu0 0.0
    %887 = vmatprep.subr.mxu0 0.0
    %888 = vmatpush2.msra.mxu0 0.0
    %889 = vmatprep.subr.mxu0 0.0
    %890 = vmatpush2.msra.mxu0 0.0
    %891 = vmatprep.subr.mxu0 0.0
    %892 = vmatpush2.msra.mxu0 0.0
    %893 = vmatprep.subr.mxu0 0.0
    %894 = vmatpush2.msra.mxu0 0.0
    %895 = vmatprep.subr.mxu0 0.0
    %896 = vmatpush2.msra.mxu0 0.0
    %897 = vmatprep.subr.mxu0 0.0
    %898 = vmatpush2.msra.mxu0 0.0
    %899 = vmatprep.subr.mxu0 0.0
    %900 = vmatpush2.msra.mxu0 0.0
    %901 = vmatprep.mubr.f32.mxu0 0.0
    %902 = vmatmul.mubr.f32.gmra.mxu0 %v835
    %v903 = vpop.f32.mrf.mxu0
    %v904 = vadd.f32 0.0, %v903
    %v905 = vpop.f32.mrf.mxu0
    %906 = vdwg.mxu0
    %v907 = vadd.f32 %v834, %v904
    %v908 = vxor.u32 %v907, 2147483648
    %v909 = vmul.f32 %v908, 1.442695
    %v910 = vpow.pop %v909
    %v911 = vadd.f32 %v910, 1.0
    %v912 = vrcp.pop %v911
    %v913 = vmul.f32 1.0, %v912
    %v914 = vtanh.pop %v907
    %v915 = vmul.f32 %v913, %v820
    %917 = vrot.lane.b32.xlu0 %v914, 64
    %v918 = vpop.permute.xlu0 %917
    %v920 = vmul.f32 %v913, %v918
    %922 = vrot.lane.b32.xlu0 %v920, 32
    %v923 = vpop.permute.xlu0 %922
    %v925 = vadd.f32 %v915, %v923
    %v926 = vtanh.pop %v925
    %928 = vrot.lane.b32.xlu0 %v926, 64
    %v929 = vpop.permute.xlu0 %928
    %v931 = vmul.f32 %v913, %v929
    %933 = vrot.lane.b32.xlu0 %v931, 32
    %v934 = vpop.permute.xlu0 %933
    %s936 = scalar_lea.vmem [#allocation3], 48
    %937 = vst.msk [vmem:[%s936] sm:$0xff] %vm200, %v934
    %s938 = scalar_lea.vmem [#allocation2], 56
    %v939 = vld [vmem:[%s938] sm:$0xff]
    %v940 = vsel %vm200, %v934, 0
    %942 = vmatprep.subr.mxu0 0.0
    %943 = vmatpush1.msra.mxu0 0.0
    %944 = vmatprep.subr.mxu0 0.0
    %945 = vmatpush1.msra.mxu0 0.0
    %946 = vmatprep.subr.mxu0 0.0
    %947 = vmatpush1.msra.mxu0 0.0
    %948 = vmatprep.subr.mxu0 0.0
    %949 = vmatpush1.msra.mxu0 0.0
    %950 = vmatprep.subr.mxu0 0.0
    %951 = vmatpush1.msra.mxu0 0.0
    %952 = vmatprep.subr.mxu0 0.0
    %953 = vmatpush1.msra.mxu0 0.0
    %954 = vmatprep.subr.mxu0 0.0
    %955 = vmatpush1.msra.mxu0 0.0
    %956 = vmatprep.subr.mxu0 0.0
    %957 = vmatpush1.msra.mxu0 0.0
    %958 = vmatprep.subr.mxu0 0.0
    %959 = vmatpush1.msra.mxu0 0.0
    %960 = vmatprep.subr.mxu0 0.0
    %961 = vmatpush1.msra.mxu0 0.0
    %962 = vmatprep.subr.mxu0 0.0
    %963 = vmatpush1.msra.mxu0 0.0
    %964 = vmatprep.subr.mxu0 0.0
    %965 = vmatpush1.msra.mxu0 0.0
    %966 = vmatprep.subr.mxu0 0.0
    %967 = vmatpush1.msra.mxu0 %v196
    %968 = vmatprep.subr.mxu0 0.0
    %969 = vmatpush1.msra.mxu0 %v195
    %970 = vmatprep.subr.mxu0 0.0
    %971 = vmatpush1.msra.mxu0 %v194
    %972 = vmatprep.subr.mxu0 0.0
    %973 = vmatpush1.msra.mxu0 %v193
    %974 = vmatprep.subr.mxu0 0.0
    %975 = vmatpush2.msra.mxu0 0.0
    %976 = vmatprep.subr.mxu0 0.0
    %977 = vmatpush2.msra.mxu0 0.0
    %978 = vmatprep.subr.mxu0 0.0
    %979 = vmatpush2.msra.mxu0 0.0
    %980 = vmatprep.subr.mxu0 0.0
    %981 = vmatpush2.msra.mxu0 0.0
    %982 = vmatprep.subr.mxu0 0.0
    %983 = vmatpush2.msra.mxu0 0.0
    %984 = vmatprep.subr.mxu0 0.0
    %985 = vmatpush2.msra.mxu0 0.0
    %986 = vmatprep.subr.mxu0 0.0
    %987 = vmatpush2.msra.mxu0 0.0
    %988 = vmatprep.subr.mxu0 0.0
    %989 = vmatpush2.msra.mxu0 0.0
    %990 = vmatprep.subr.mxu0 0.0
    %991 = vmatpush2.msra.mxu0 0.0
    %992 = vmatprep.subr.mxu0 0.0
    %993 = vmatpush2.msra.mxu0 0.0
    %994 = vmatprep.subr.mxu0 0.0
    %995 = vmatpush2.msra.mxu0 0.0
    %996 = vmatprep.subr.mxu0 0.0
    %997 = vmatpush2.msra.mxu0 0.0
    %998 = vmatprep.subr.mxu0 0.0
    %999 = vmatpush2.msra.mxu0 0.0
    %1000 = vmatprep.subr.mxu0 0.0
    %1001 = vmatpush2.msra.mxu0 0.0
    %1002 = vmatprep.subr.mxu0 0.0
    %1003 = vmatpush2.msra.mxu0 0.0
    %1004 = vmatprep.subr.mxu0 0.0
    %1005 = vmatpush2.msra.mxu0 0.0
    %1006 = vmatprep.mubr.f32.mxu0 0.0
    %1007 = vmatmul.mubr.f32.gmra.mxu0 %v940
    %v1008 = vpop.f32.mrf.mxu0
    %v1009 = vadd.f32 0.0, %v1008
    %v1010 = vpop.f32.mrf.mxu0
    %1011 = vdwg.mxu0
    %v1012 = vadd.f32 %v939, %v1009
    %v1013 = vxor.u32 %v1012, 2147483648
    %v1014 = vmul.f32 %v1013, 1.442695
    %v1015 = vpow.pop %v1014
    %v1016 = vadd.f32 %v1015, 1.0
    %v1017 = vrcp.pop %v1016
    %v1018 = vmul.f32 1.0, %v1017
    %v1019 = vtanh.pop %v1012
    %v1020 = vmul.f32 %v1018, %v925
    %1022 = vrot.lane.b32.xlu0 %v1019, 64
    %v1023 = vpop.permute.xlu0 %1022
    %v1025 = vmul.f32 %v1018, %v1023
    %1027 = vrot.lane.b32.xlu0 %v1025, 32
    %v1028 = vpop.permute.xlu0 %1027
    %v1030 = vadd.f32 %v1020, %v1028
    %v1031 = vtanh.pop %v1030
    %1033 = vrot.lane.b32.xlu0 %v1031, 64
    %v1034 = vpop.permute.xlu0 %1033
    %v1036 = vmul.f32 %v1018, %v1034
    %1038 = vrot.lane.b32.xlu0 %v1036, 32
    %v1039 = vpop.permute.xlu0 %1038
    %s1041 = scalar_lea.vmem [#allocation3], 56
    %1042 = vst.msk [vmem:[%s1041] sm:$0xff] %vm200, %v1039
    %1043 = vst.msk [vmem:[#allocation6] sm:$0xff] %vm200, %v1039
    %1045 = vrot.lane.b32.xlu0 %v1030, 96
    %v1046 = vpop.permute.xlu0 %1045
    %1048 = vst.msk [vmem:[#allocation8] sm:$0xff] %vm200, %v1046
    %v1049 = vld [vmem:[#allocation3] sm:$0xff]
    %v1050 = vld [vmem:[#allocation3 + $0x8] sm:$0xff]
    %v1051 = vld [vmem:[#allocation3 + $0x10] sm:$0xff]
    %v1052 = vld [vmem:[#allocation3 + $0x18] sm:$0xff]
    %v1053 = vld [vmem:[#allocation3 + $0x20] sm:$0xff]
    %v1054 = vld [vmem:[#allocation3 + $0x28] sm:$0xff]
    %v1055 = vld [vmem:[#allocation3 + $0x30] sm:$0xff]
    %v1056 = vld [vmem:[#allocation3 + $0x38] sm:$0xff]
    %v1057 = vld [vmem:[%s4] sm:$0xff]
    %v1058 = vld [vmem:[%s4 + $0x8] sm:$0xff]
    %v1059 = vld [vmem:[%s4 + $0x10] sm:$0xff]
    %v1060 = vld [vmem:[%s4 + $0x18] sm:$0xff]
    %v1061 = vld [vmem:[%s5] sm:$0x1]
    %v1063 = vlaneseq
    %v1064 = vshrl.u32 %v1063, 7
    %v1065 = vsub.s32 0, %v1064
    %v1066 = vrot.slane %v1061, %v1065
    %v1069 = vsel %vm200, %v1049, 0
    %v1072 = vsel %vm200, %v1050, 0
    %v1075 = vsel %vm200, %v1051, 0
    %v1078 = vsel %vm200, %v1052, 0
    %v1081 = vsel %vm200, %v1053, 0
    %v1084 = vsel %vm200, %v1054, 0
    %v1087 = vsel %vm200, %v1055, 0
    %v1090 = vsel %vm200, %v1056, 0
    %1092 = vmatprep.subr.mxu0 0.0
    %1093 = vmatpush1.msra.mxu0 0.0
    %1094 = vmatprep.subr.mxu0 0.0
    %1095 = vmatpush1.msra.mxu0 0.0
    %1096 = vmatprep.subr.mxu0 0.0
    %1097 = vmatpush1.msra.mxu0 0.0
    %1098 = vmatprep.subr.mxu0 0.0
    %1099 = vmatpush1.msra.mxu0 0.0
    %1100 = vmatprep.subr.mxu0 0.0
    %1101 = vmatpush1.msra.mxu0 0.0
    %1102 = vmatprep.subr.mxu0 0.0
    %1103 = vmatpush1.msra.mxu0 0.0
    %1104 = vmatprep.subr.mxu0 0.0
    %1105 = vmatpush1.msra.mxu0 0.0
    %1106 = vmatprep.subr.mxu0 0.0
    %1107 = vmatpush1.msra.mxu0 0.0
    %1108 = vmatprep.subr.mxu0 0.0
    %1109 = vmatpush1.msra.mxu0 0.0
    %1110 = vmatprep.subr.mxu0 0.0
    %1111 = vmatpush1.msra.mxu0 0.0
    %1112 = vmatprep.subr.mxu0 0.0
    %1113 = vmatpush1.msra.mxu0 0.0
    %1114 = vmatprep.subr.mxu0 0.0
    %1115 = vmatpush1.msra.mxu0 0.0
    %1116 = vmatprep.subr.mxu0 0.0
    %1117 = vmatpush1.msra.mxu0 %v1060
    %1118 = vmatprep.subr.mxu0 0.0
    %1119 = vmatpush1.msra.mxu0 %v1059
    %1120 = vmatprep.subr.mxu0 0.0
    %1121 = vmatpush1.msra.mxu0 %v1058
    %1122 = vmatprep.subr.mxu0 0.0
    %1123 = vmatpush1.msra.mxu0 %v1057
    %1124 = vmatprep.subr.mxu0 0.0
    %1125 = vmatpush2.msra.mxu0 0.0
    %1126 = vmatprep.subr.mxu0 0.0
    %1127 = vmatpush2.msra.mxu0 0.0
    %1128 = vmatprep.subr.mxu0 0.0
    %1129 = vmatpush2.msra.mxu0 0.0
    %1130 = vmatprep.subr.mxu0 0.0
    %1131 = vmatpush2.msra.mxu0 0.0
    %1132 = vmatprep.subr.mxu0 0.0
    %1133 = vmatpush2.msra.mxu0 0.0
    %1134 = vmatprep.subr.mxu0 0.0
    %1135 = vmatpush2.msra.mxu0 0.0
    %1136 = vmatprep.subr.mxu0 0.0
    %1137 = vmatpush2.msra.mxu0 0.0
    %1138 = vmatprep.subr.mxu0 0.0
    %1139 = vmatpush2.msra.mxu0 0.0
    %1140 = vmatprep.subr.mxu0 0.0
    %1141 = vmatpush2.msra.mxu0 0.0
    %1142 = vmatprep.subr.mxu0 0.0
    %1143 = vmatpush2.msra.mxu0 0.0
    %1144 = vmatprep.subr.mxu0 0.0
    %1145 = vmatpush2.msra.mxu0 0.0
    %1146 = vmatprep.subr.mxu0 0.0
    %1147 = vmatpush2.msra.mxu0 0.0
    %1148 = vmatprep.subr.mxu0 0.0
    %1149 = vmatpush2.msra.mxu0 0.0
    %1150 = vmatprep.subr.mxu0 0.0
    %1151 = vmatpush2.msra.mxu0 0.0
    %1152 = vmatprep.subr.mxu0 0.0
    %1153 = vmatpush2.msra.mxu0 0.0
    %1154 = vmatprep.subr.mxu0 0.0
    %1155 = vmatpush2.msra.mxu0 0.0
    %1156 = vmatprep.mubr.f32.mxu0 0.0
    %1157 = vmatmul.mubr.f32.gmra.mxu0 %v1069
    %v1158 = vpop.f32.mrf.mxu0
    %v1159 = vadd.f32 %v1066, %v1158
    %v1160 = vpop.f32.mrf.mxu0
    %1161 = vmatprep.mubr.f32.mxu0 0.0
    %1162 = vmatmul.mubr.f32.gmra.mxu0 %v1072
    %v1163 = vpop.f32.mrf.mxu0
    %v1164 = vadd.f32 %v1066, %v1163
    %v1165 = vpop.f32.mrf.mxu0
    %1166 = vmatprep.mubr.f32.mxu0 0.0
    %1167 = vmatmul.mubr.f32.gmra.mxu0 %v1075
    %v1168 = vpop.f32.mrf.mxu0
    %v1169 = vadd.f32 %v1066, %v1168
    %v1170 = vpop.f32.mrf.mxu0
    %1171 = vmatprep.mubr.f32.mxu0 0.0
    %1172 = vmatmul.mubr.f32.gmra.mxu0 %v1078
    %v1173 = vpop.f32.mrf.mxu0
    %v1174 = vadd.f32 %v1066, %v1173
    %v1175 = vpop.f32.mrf.mxu0
    %1176 = vmatprep.mubr.f32.mxu0 0.0
    %1177 = vmatmul.mubr.f32.gmra.mxu0 %v1081
    %v1178 = vpop.f32.mrf.mxu0
    %v1179 = vadd.f32 %v1066, %v1178
    %v1180 = vpop.f32.mrf.mxu0
    %1181 = vmatprep.mubr.f32.mxu0 0.0
    %1182 = vmatmul.mubr.f32.gmra.mxu0 %v1084
    %v1183 = vpop.f32.mrf.mxu0
    %v1184 = vadd.f32 %v1066, %v1183
    %v1185 = vpop.f32.mrf.mxu0
    %1186 = vmatprep.mubr.f32.mxu0 0.0
    %1187 = vmatmul.mubr.f32.gmra.mxu0 %v1087
    %v1188 = vpop.f32.mrf.mxu0
    %v1189 = vadd.f32 %v1066, %v1188
    %v1190 = vpop.f32.mrf.mxu0
    %1191 = vmatprep.mubr.f32.mxu0 0.0
    %1192 = vmatmul.mubr.f32.gmra.mxu0 %v1090
    %v1193 = vpop.f32.mrf.mxu0
    %v1194 = vadd.f32 %v1066, %v1193
    %v1195 = vpop.f32.mrf.mxu0
    %1196 = vdwg.mxu0
    %1197 = vst [vmem:[#allocation4] sm:$0xff] %v1159
    %1198 = vst [vmem:[#allocation4 + $0x8] sm:$0xff] %v1164
    %1199 = vst [vmem:[#allocation4 + $0x10] sm:$0xff] %v1169
    %1200 = vst [vmem:[#allocation4 + $0x18] sm:$0xff] %v1174
    %1201 = vst [vmem:[#allocation4 + $0x20] sm:$0xff] %v1179
    %1202 = vst [vmem:[#allocation4 + $0x28] sm:$0xff] %v1184
    %1203 = vst [vmem:[#allocation4 + $0x30] sm:$0xff] %v1189
    %1204 = vst [vmem:[#allocation4 + $0x38] sm:$0xff] %v1194
    // Predicated region
    $region30: #{tpu_custom_call.1} parent=1 // pred_check
      _
    $region31: #{tpu_custom_call.1} parent=1 // pred_check_branch
      %1206 = sbr.rel (0) target = $region33
    $region32: #{tpu_custom_call.1} parent=1 // pred_region
      %s1208 = ssub.s32 1024, 1024
      %1209 = vsyncadd [#allocation5], %s1208
      %s1210 = sshll.u32 [#allocation4], 4
      %s1211 = int_to_ptr.vmem [resolvable:$true] %s1210
      %1216 = dma.vmem_to_hbm [thread:$0]  %s1211, 1024, %s6, [#allocation5], 128, 128, 8
    $region33: #{tpu_custom_call.1} parent=1 // pred_fallthru
      _
    // Predicated region
    $region34: #{tpu_custom_call.1} parent=1 // pred_check
      _
    $region35: #{tpu_custom_call.1} parent=1 // pred_check_branch
      %1218 = sbr.rel (0) target = $region37
    $region36: #{tpu_custom_call.1} parent=1 // pred_region
      %s1220 = ssub.s32 128, 128
      %1221 = vsyncadd [#allocation7], %s1220
      %s1223 = sshll.u32 [#allocation6], 4
      %s1224 = int_to_ptr.vmem [resolvable:$true] %s1223
      %1226 = dma.vmem_to_hbm [thread:$0]  %s1224, 128, %s7, [#allocation7]
    $region37: #{tpu_custom_call.1} parent=1 // pred_fallthru
      _
    // Predicated region
    $region38: #{tpu_custom_call.1} parent=1 // pred_check
      _
    $region39: #{tpu_custom_call.1} parent=1 // pred_check_branch
      %1228 = sbr.rel (0) target = $region41
    $region40: #{tpu_custom_call.1} parent=1 // pred_region
      %s1230 = ssub.s32 128, 128
      %1231 = vsyncadd [#allocation7], %s1230
      %s1233 = sshll.u32 [#allocation8], 4
      %s1234 = int_to_ptr.vmem [resolvable:$true] %s1233
      %1236 = dma.vmem_to_hbm [thread:$0]  %s1234, 128, %s8, [#allocation7]
    $region41: #{tpu_custom_call.1} parent=1 // pred_fallthru
      _
    // Predicated region
    $region42: #{tpu_custom_call.1} parent=1 // pred_check
      _
    $region43: #{tpu_custom_call.1} parent=1 // pred_check_branch
      %1238 = sbr.rel (0) target = $region45
    $region44: #{tpu_custom_call.1} parent=1 // pred_region
      %1239 = dma.done [#allocation5], 1024
    $region45: #{tpu_custom_call.1} parent=1 // pred_fallthru
      _
    // Predicated region
    $region46: #{tpu_custom_call.1} parent=1 // pred_check
      _
    $region47: #{tpu_custom_call.1} parent=1 // pred_check_branch
      %1241 = sbr.rel (0) target = $region49
    $region48: #{tpu_custom_call.1} parent=1 // pred_region
      %1242 = dma.done [#allocation7], 128
    $region49: #{tpu_custom_call.1} parent=1 // pred_fallthru
      _
    // Predicated region
    $region50: #{tpu_custom_call.1} parent=1 // pred_check
      _
    $region51: #{tpu_custom_call.1} parent=1 // pred_check_branch
      %1244 = sbr.rel (0) target = $region53
    $region52: #{tpu_custom_call.1} parent=1 // pred_region
      %1245 = dma.done [#allocation7], 128
    $region53: #{tpu_custom_call.1} parent=1 // pred_fallthru
      _
    %1246 = vsyncpa [#allocation5], 1
    %1247 = vsyncpa [#allocation7], 1

</llo_original>
